<compile_context>
chip_gen: v5e
topology: v5e:2x2
jax: 0.10.0
libtpu: 0.0.40
codegen_flags: <defaults>
</compile_context>

<pallas_src>
import functools
import math

import jax
import jax.numpy as jnp
from jax.experimental import pallas as pl
from jax.experimental.pallas import tpu as pltpu


# ----------------------------------------------------------------------------
# Static helpers (trace-time)
# ----------------------------------------------------------------------------
def _pick_band(HW, cout, target_elems=8192):
    """Largest power-of-two band size that divides HW and keeps the per-band
    f32 accumulator around <=32 KiB so it stays (mostly) vreg-resident."""
    target = max(8, target_elems // max(int(cout), 1))
    mb = 1
    while mb * 2 <= min(HW, target) and HW % (mb * 2) == 0:
        mb *= 2
    return mb


def _nstack(w):
    """(3, 3, Cin, Cout) HWIO weights -> (3, Cin, 3*Cout): for each dy, the
    three dx taps are concatenated along the output-channel (lane) axis."""
    dy, dx, ci, co = w.shape
    return jnp.transpose(w, (0, 2, 1, 3)).reshape(dy, ci, dx * co)


# ----------------------------------------------------------------------------
# In-kernel helpers (traced inside Pallas bodies)
# ----------------------------------------------------------------------------
def _zero_pads(S, H, W):
    """Zero the top / bottom pad rows of a flat padded scratch
    of shape ((H+2)*W + 2, C).  Image region is untouched."""
    HW = H * W
    C = S.shape[1]
    S[pl.ds(0, W + 1), :] = jnp.zeros((W + 1, C), S.dtype)
    S[pl.ds(1 + W + HW, W + 1), :] = jnp.zeros((W + 1, C), S.dtype)


def _band_conv(srcs, W, Mb, cout, r0):
    """3x3 'SAME' conv for one band of Mb flattened output pixels starting at
    flat index r0.  `srcs` is a list of (flat_padded_scratch, nstacked_weight)
    pairs whose contributions are summed (used for the concat-free decoder).

    Per dy: ONE dot of the (Mb+2, Cin) slice against the (Cin, 3*Cout)
    N-stacked weight; the dx shift is recovered by slicing the f32 product.
    Horizontal wrap-around of the flat layout is fixed with two column masks
    applied once to the dx=0 / dx=2 partial sums.
    """
    center_only = (W == 1)          # dx=0 / dx=2 are fully masked when W == 1
    acc_c = jnp.zeros((Mb, cout), jnp.float32)
    if not center_only:
        acc_l = jnp.zeros((Mb, cout), jnp.float32)
        acc_r = jnp.zeros((Mb, cout), jnp.float32)

    for (S, w_ref) in srcs:
        for dy in range(3):
            if center_only:
                u = S[pl.ds(r0 + dy * W + 1, Mb), :]              # (Mb, Cin)
                wc = w_ref[dy][:, cout:2 * cout]                  # (Cin, Cout)
                acc_c = acc_c + jnp.dot(u, wc,
                                        preferred_element_type=jnp.float32)
            else:
                u = S[pl.ds(r0 + dy * W, Mb + 2), :]              # (Mb+2, Cin)
                big = jnp.dot(u, w_ref[dy],                       # (Mb+2, 3Co)
                              preferred_element_type=jnp.float32)
                acc_l = acc_l + big[0:Mb, 0:cout]
                acc_c = acc_c + big[1:Mb + 1, cout:2 * cout]
                acc_r = acc_r + big[2:Mb + 2, 2 * cout:3 * cout]

    if center_only:
        return acc_c
    col = (jax.lax.broadcasted_iota(jnp.int32, (Mb, 1), 0) + r0) % W
    mask_l = (col > 0).astype(jnp.float32)          # kill left wrap  (dx=0, j=0)
    mask_r = (col < W - 1).astype(jnp.float32)      # kill right wrap (dx=2, j=W-1)
    return acc_c + acc_l * mask_l + acc_r * mask_r


def _run_conv(srcs, write_fn, HW, W, Mb, cout, s_ref, b_ref):
    """Run one conv + folded-BN + ReLU over all bands of the image."""
    nb = HW // Mb
    scale = s_ref[...]          # (1, Cout) f32, hoisted out of the band loop
    bias = b_ref[...]

    def body(i, carry):
        r0 = i * Mb
        res = _band_conv(srcs, W, Mb, cout, r0)
        y = jnp.maximum(res * scale + bias, 0.0)    # f32 epilogue
        write_fn(r0, y)
        return carry

    jax.lax.fori_loop(0, nb, body, 0, unroll=nb <= 8)


# ----------------------------------------------------------------------------
# Pallas kernels
# ----------------------------------------------------------------------------
def _fused_convs_kernel(x_ref, *rest, H, W, n_convs, band):
    """Fused chain of n_convs x (3x3 conv + folded BN + ReLU) for one image.

    x_ref : (1, H*W, Cin) bf16
    rest  : [wN_i (3,Ci,3*Co) bf16, s_i (1,Co) f32, b_i (1,Co) f32] * n_convs,
            o_ref (1, H*W, Cout_last), then n_convs flat VMEM scratches.
    """
    params = rest[:3 * n_convs]
    o_ref = rest[3 * n_convs]
    scratches = rest[3 * n_convs + 1:]
    HW = H * W

    # Re-zeroed every step: safe under megacore grid partitioning (see header).
    for S in scratches:
        _zero_pads(S, H, W)
    scratches[0][pl.ds(1 + W, HW), :] = x_ref[0].astype(scratches[0].dtype)

    for i in range(n_convs):
        w_ref, s_ref, b_ref = params[3 * i:3 * i + 3]
        cout = s_ref.shape[1]
        if i + 1 < n_convs:
            dst = scratches[i + 1]

            def write_fn(r0, y, dst=dst, W=W):
                dst[pl.ds(1 + W + r0, y.shape[0]), :] = y.astype(dst.dtype)
        else:

            def write_fn(r0, y, o_ref=o_ref):
                o_ref[0, pl.ds(r0, y.shape[0]), :] = y.astype(o_ref.dtype)

        _run_conv([(scratches[i], w_ref)], write_fn, HW, W, band, cout,
                  s_ref, b_ref)


def _fused_upblock_kernel(skip_ref, up_ref, w1s_ref, w1u_ref, s1_ref, b1_ref,
                          w2_ref, s2_ref, b2_ref, o_ref, ss, su, sm,
                          *, H, W, band):
    """Decoder block: conv1 over [skip ; up] (weights split along Cin, so the
    concat is never materialized) followed by conv2, all VMEM-resident."""
    HW = H * W
    for S in (ss, su, sm):
        _zero_pads(S, H, W)
    ss[pl.ds(1 + W, HW), :] = skip_ref[0].astype(ss.dtype)
    su[pl.ds(1 + W, HW), :] = up_ref[0].astype(su.dtype)

    cmid = s1_ref.shape[1]
    cout = s2_ref.shape[1]

    def write_mid(r0, y):
        sm[pl.ds(1 + W + r0, y.shape[0]), :] = y.astype(sm.dtype)

    _run_conv([(ss, w1s_ref), (su, w1u_ref)], write_mid, HW, W, band, cmid,
              s1_ref, b1_ref)

    def write_out(r0, y):
        o_ref[0, pl.ds(r0, y.shape[0]), :] = y.astype(o_ref.dtype)

    _run_conv([(sm, w2_ref)], write_out, HW, W, band, cout, s2_ref, b2_ref)


def _head_kernel(x_ref, w_ref, b_ref, o_ref, *, apply_sigmoid):
    """1x1 conv head with lane-dense output.

    x_ref: (1, Cin, H*W) bf16 ; w_ref: (n_labels, Cin) bf16 ;
    b_ref: (n_labels, 1) f32  ; o_ref: (1, n_labels, H*W) f32.
    """
    logits = jnp.dot(w_ref[...], x_ref[0],
                     preferred_element_type=jnp.float32) + b_ref[...]
    if apply_sigmoid:
        logits = 1.0 / (1.0 + jnp.exp(-logits))
    o_ref[0] = logits.astype(o_ref.dtype)


# ----------------------------------------------------------------------------
# Wrappers
# ----------------------------------------------------------------------------
_COMPILER_PARAMS = pltpu.CompilerParams(
    dimension_semantics=("parallel",),
    vmem_limit_bytes=32 * 1024 * 1024,
)


def fused_convs(x, conv_params, out_dtype=jnp.bfloat16):
    """x: (B, H, W, Cin) -> (B, H, W, Cout).  One pallas_call for the whole
    chain of ConvBatchNorm layers in `conv_params`."""
    B, H, W, Cin = x.shape
    HW = H * W
    NT = (H + 2) * W + 2
    n = len(conv_params)
    co_last = conv_params[-1]["w"].shape[3]
    co_max = max(p["w"].shape[3] for p in conv_params)
    band = _pick_band(HW, co_max)

    args = [x.reshape(B, HW, Cin)]
    in_specs = [pl.BlockSpec((1, HW, Cin), lambda b: (b, 0, 0))]
    scratch = []
    for p in conv_params:
        ci, co = p["w"].shape[2], p["w"].shape[3]
        args += [_nstack(p["w"]).astype(jnp.bfloat16),
                 p["scale"].reshape(1, co).astype(jnp.float32),
                 p["bias"].reshape(1, co).astype(jnp.float32)]
        in_specs += [pl.BlockSpec((3, ci, 3 * co), lambda b: (0, 0, 0)),
                     pl.BlockSpec((1, co), lambda b: (0, 0)),
                     pl.BlockSpec((1, co), lambda b: (0, 0))]
        scratch.append(pltpu.VMEM((NT, ci), jnp.bfloat16))

    out = pl.pallas_call(
        functools.partial(_fused_convs_kernel, H=H, W=W, n_convs=n, band=band),
        out_shape=jax.ShapeDtypeStruct((B, HW, co_last), out_dtype),
        grid=(B,),
        in_specs=in_specs,
        out_specs=pl.BlockSpec((1, HW, co_last), lambda b: (b, 0, 0)),
        scratch_shapes=scratch,
        compiler_params=_COMPILER_PARAMS,
    )(*args)
    return out.reshape(B, H, W, co_last)


def fused_upblock(x_small, skip, p):
    """UpBlock (backbone part): nearest x2 upsample of x_small, concat-free
    first conv (split weights), second conv, all in one pallas_call."""
    B, H, W, Cs = skip.shape
    # TODO(synk): fuse the nearest x2 upsample into the scratch fill to avoid
    # materializing the 4x-larger tensor in HBM (review item).
    up = jnp.repeat(jnp.repeat(x_small, 2, axis=1), 2, axis=2)
    Cu = up.shape[-1]
    Cmid = p["w1_skip"].shape[-1]
    Cout = p["w2"].shape[-1]
    HW = H * W
    NT = (H + 2) * W + 2
    band = _pick_band(HW, max(Cmid, Cout))

    out = pl.pallas_call(
        functools.partial(_fused_upblock_kernel, H=H, W=W, band=band),
        out_shape=jax.ShapeDtypeStruct((B, HW, Cout), jnp.bfloat16),
        grid=(B,),
        in_specs=[
            pl.BlockSpec((1, HW, Cs), lambda b: (b, 0, 0)),
            pl.BlockSpec((1, HW, Cu), lambda b: (b, 0, 0)),
            pl.BlockSpec((3, Cs, 3 * Cmid), lambda b: (0, 0, 0)),
            pl.BlockSpec((3, Cu, 3 * Cmid), lambda b: (0, 0, 0)),
            pl.BlockSpec((1, Cmid), lambda b: (0, 0)),
            pl.BlockSpec((1, Cmid), lambda b: (0, 0)),
            pl.BlockSpec((3, Cmid, 3 * Cout), lambda b: (0, 0, 0)),
            pl.BlockSpec((1, Cout), lambda b: (0, 0)),
            pl.BlockSpec((1, Cout), lambda b: (0, 0)),
        ],
        out_specs=pl.BlockSpec((1, HW, Cout), lambda b: (b, 0, 0)),
        scratch_shapes=[pltpu.VMEM((NT, Cs), jnp.bfloat16),
                        pltpu.VMEM((NT, Cu), jnp.bfloat16),
                        pltpu.VMEM((NT, Cmid), jnp.bfloat16)],
        compiler_params=_COMPILER_PARAMS,
    )(skip.reshape(B, HW, Cs),
      up.reshape(B, HW, Cu),
      _nstack(p["w1_skip"]).astype(jnp.bfloat16),
      _nstack(p["w1_up"]).astype(jnp.bfloat16),
      p["s1"].reshape(1, Cmid).astype(jnp.float32),
      p["b1"].reshape(1, Cmid).astype(jnp.float32),
      _nstack(p["w2"]).astype(jnp.bfloat16),
      p["s2"].reshape(1, Cout).astype(jnp.float32),
      p["b2"].reshape(1, Cout).astype(jnp.float32))
    return out.reshape(B, H, W, Cout)


def conv1x1_head(x, w, b, apply_sigmoid=False):
    """x: (B, H, W, Cin) -> (B, n_labels, H, W) with a lane-dense (B,nl,H*W)
    Pallas output (spatial on the 128-lane axis)."""
    B, H, W, Cin = x.shape
    HW = H * W
    n_labels = w.shape[-1]
    xt = jnp.swapaxes(x.reshape(B, HW, Cin), 1, 2)          # (B, Cin, HW)
    out = pl.pallas_call(
        functools.partial(_head_kernel, apply_sigmoid=apply_sigmoid),
        out_shape=jax.ShapeDtypeStruct((B, n_labels, HW), jnp.float32),
        grid=(B,),
        in_specs=[pl.BlockSpec((1, Cin, HW), lambda b: (b, 0, 0)),
                  pl.BlockSpec((n_labels, Cin), lambda b: (0, 0)),
                  pl.BlockSpec((n_labels, 1), lambda b: (0, 0))],
        out_specs=pl.BlockSpec((1, n_labels, HW), lambda b: (b, 0, 0)),
        compiler_params=_COMPILER_PARAMS,
    )(xt,
      jnp.transpose(w).astype(jnp.bfloat16),
      b.reshape(n_labels, 1).astype(jnp.float32))
    return out.reshape(B, n_labels, H, W)


# ----------------------------------------------------------------------------
# Plain-JAX glue (cheap data movement, no hot compute)
# ----------------------------------------------------------------------------
def maxpool2(x):                       # nn.MaxPool2d(2)
    # TODO(synk): emit the pooled tensor as a second output of fused_convs to
    # avoid re-reading encoder activations from HBM (review item).
    B, H, W, C = x.shape
    return jnp.max(x.reshape(B, H // 2, 2, W // 2, 2, C), axis=(2, 4))


# ----------------------------------------------------------------------------
# Deterministic parameter init (BN folded with running_mean=0, running_var=1).
# ----------------------------------------------------------------------------
def _init_convbn(key, cin, cout):
    k = jax.random.split(key, 4)
    w = jax.random.normal(k[0], (3, 3, cin, cout), jnp.float32) / math.sqrt(9 * cin)
    conv_b = 0.01 * jax.random.normal(k[1], (cout,), jnp.float32)
    gamma = 1.0 + 0.1 * jax.random.normal(k[2], (cout,), jnp.float32)
    beta = 0.1 * jax.random.normal(k[3], (cout,), jnp.float32)
    scale = gamma / math.sqrt(1.0 + 1e-5)
    bias = conv_b * scale + beta
    return dict(w=w, scale=scale, bias=bias)


def _init_nconvs(key, cin, cout, nb):
    keys = jax.random.split(key, nb)
    chans = [cin] + [cout] * nb
    return [_init_convbn(keys[i], chans[i], chans[i + 1]) for i in range(nb)]


def _init_upblock(key, c_skip, c_up, cout):
    k1, k2 = jax.random.split(key)
    p1 = _init_convbn(k1, c_skip + c_up, cout)    # conv over cat([skip, up])
    p2 = _init_convbn(k2, cout, cout)
    return dict(w1_skip=p1["w"][:, :, :c_skip, :],
                w1_up=p1["w"][:, :, c_skip:, :],
                s1=p1["scale"], b1=p1["bias"],
                w2=p2["w"], s2=p2["scale"], b2=p2["bias"])


def init_cdnet_params(key, n_channels=3, base=16, n_labels=1):
    keys = jax.random.split(key, 12)
    p = {}
    p["inc"] = [_init_convbn(keys[0], n_channels, base)]
    p["down1"] = _init_nconvs(keys[1], base, base * 2, 2)
    p["down2"] = _init_nconvs(keys[2], base * 2, base * 4, 2)
    p["down3"] = _init_nconvs(keys[3], base * 4, base * 8, 2)
    p["down4"] = _init_nconvs(keys[4], base * 8, base * 8, 2)
    p["up4"] = _init_upblock(keys[5], base * 8, base * 8, base * 4)
    p["up3"] = _init_upblock(keys[6], base * 4, base * 4, base * 2)
    p["up2"] = _init_upblock(keys[7], base * 2, base * 2, base)
    p["up1"] = _init_upblock(keys[8], base, base, base // 2)
    p["outc_w"] = jax.random.normal(keys[9], (base // 2, n_labels),
                                    jnp.float32) / math.sqrt(base // 2)
    p["outc_b"] = jnp.zeros((n_labels,), jnp.float32)
    return p


# ----------------------------------------------------------------------------
# Forward pass
# ----------------------------------------------------------------------------
def cdnet_forward(params, x_nchw, n_labels=1):
    """x_nchw: (B, C, H, W) float32 (PyTorch layout)."""
    x = jnp.transpose(x_nchw, (0, 2, 3, 1)).astype(jnp.bfloat16)   # NHWC, bf16
    B = x.shape[0]

    # ---- Encoder (U-Net backbone) ----
    x1 = fused_convs(x, params["inc"])
    # TODO(synk): MBConvBlock / ScaledDotProductAttention / DAConv fusion branch
    #             and downVit VisionTransformers are not defined in the source.
    x2 = fused_convs(maxpool2(x1), params["down1"])
    x3 = fused_convs(maxpool2(x2), params["down2"])
    x4 = fused_convs(maxpool2(x3), params["down3"])
    x5 = fused_convs(maxpool2(x4), params["down4"])

    # ---- Decoder ----
    # TODO(synk): upVit / Reconstruct / Attention_block / PixLevelModule are not
    #             defined; decoder = nearest-upsample + (concat-free) nConvs.
    d = fused_upblock(x5, x4, params["up4"])
    d = fused_upblock(d, x3, params["up3"])
    d = fused_upblock(d, x2, params["up2"])
    d = fused_upblock(d, x1, params["up1"])

    logits = conv1x1_head(d, params["outc_w"], params["outc_b"],
                          apply_sigmoid=(n_labels == 1))            # NCHW already

    # TODO(synk): AdaptiveFeatureResizer (self.rfs) definition not provided;
    #             returning flattened bottleneck features x5 in its place.
    feats = x5.reshape(B, -1).astype(jnp.float32)
    return logits, feats


# ----------------------------------------------------------------------------
if __name__ == "__main__":
    key = jax.random.PRNGKey(0)
    kp, kx = jax.random.split(key)

    B, C, H, W = 2, 3, 16, 16     # small shapes consistent with the module
    base = 16                     # args.base_channel
    n_labels = 1                  # args.n_labels -> sigmoid head

    params = init_cdnet_params(kp, n_channels=C, base=base, n_labels=n_labels)
    x = jax.random.normal(kx, (B, C, H, W), jnp.float32)

    def _close(a, b, tol):
        return float(jnp.max(jnp.abs(a - b))) <= tol * max(1.0, float(jnp.max(jnp.abs(b))))

    def _ref_convbn(z, p):
        w = p["w"].astype(jnp.bfloat16).astype(jnp.float32)
        y = jax.lax.conv_general_dilated(z, w, (1, 1), "SAME",
                                         dimension_numbers=("NHWC", "HWIO", "NHWC"))
        return jnp.maximum(y * p["scale"] + p["bias"], 0.0)

    # sanity 1: fused single-conv block matches lax conv + BN affine + ReLU
    x_nhwc = jnp.transpose(x, (0, 2, 3, 1)).astype(jnp.bfloat16)
    got = fused_convs(x_nhwc, params["inc"], out_dtype=jnp.float32)
    ref = _ref_convbn(x_nhwc.astype(jnp.float32), params["inc"][0])
    assert _close(got, ref, 2e-2), "inc conv kernel mismatch"

    # sanity 2: fused double-conv block (down1) matches two chained lax convs
    x1 = got.astype(jnp.bfloat16)
    z = maxpool2(x1)
    got2 = fused_convs(z, params["down1"], out_dtype=jnp.float32)
    mid = _ref_convbn(z.astype(jnp.float32), params["down1"][0])
    mid = mid.astype(jnp.bfloat16).astype(jnp.float32)
    ref2 = _ref_convbn(mid, params["down1"][1])
    assert _close(got2, ref2, 3e-2), "down1 fused block mismatch"

    # sanity 3: lane-dense 1x1 head matches a plain einsum + sigmoid
    dh = jax.random.normal(jax.random.split(kx)[0], (B, H, W, base // 2),
                           jnp.float32).astype(jnp.bfloat16)
    wt = params["outc_w"].astype(jnp.bfloat16).astype(jnp.float32)
    ref_h = 1.0 / (1.0 + jnp.exp(-(jnp.einsum("bhwc,cl->blhw",
                                              dh.astype(jnp.float32), wt)
                                   + params["outc_b"].reshape(1, n_labels, 1, 1))))
    got_h = conv1x1_head(dh, params["outc_w"], params["outc_b"], apply_sigmoid=True)
    assert _close(got_h, ref_h, 1e-2), "outc head mismatch"

    # full forward
    fwd = jax.jit(functools.partial(cdnet_forward, n_labels=n_labels))
    logits, feats = fwd(params, x)
    jax.block_until_ready((logits, feats))

    assert logits.shape == (B, n_labels, H, W)
    assert feats.shape == (B, base * 8 * (H // 16) * (W // 16))
    print("KERNEL_OK")
</pallas_src>

<mosaic_0001>
module attributes {stable_mosaic.version = 11 : i64} {
  func.func @_fused_convs_kernel(%arg0: i32, %arg1: memref<1x256x3xbf16, #tpu.memory_space<vmem>>, %arg2: memref<3x3x48xbf16, #tpu.memory_space<vmem>>, %arg3: memref<1x16xf32, #tpu.memory_space<vmem>>, %arg4: memref<1x16xf32, #tpu.memory_space<vmem>>, %arg5: memref<1x256x16xf32, #tpu.memory_space<vmem>>, %arg6: memref<290x3xbf16, #tpu.memory_space<vmem>>) attributes {dimension_semantics = [#tpu.dimension_semantics<parallel>], iteration_bounds = array<i64: 2>, scalar_prefetch = 0 : i64, scratch_operands = 1 : i64, tpu.core_type = #tpu.core_type<tc>, window_params = [{transform_indices = @transform_0, window_bounds = array<i64: 1, 256, 3>}, {pipeline_mode = #tpu.pipeline_mode<synchronous>, transform_indices = @transform_1, window_bounds = array<i64: 3, 3, 48>}, {pipeline_mode = #tpu.pipeline_mode<synchronous>, transform_indices = @transform_2, window_bounds = array<i64: 1, 16>}, {pipeline_mode = #tpu.pipeline_mode<synchronous>, transform_indices = @transform_3, window_bounds = array<i64: 1, 16>}, {transform_indices = @transform_4, window_bounds = array<i64: 1, 256, 16>}]} {
    %cst = arith.constant 0.000000e+00 : bf16
    %0 = vector.broadcast %cst : bf16 to vector<17x3xbf16>
    %c0 = arith.constant 0 : index
    %c0_0 = arith.constant 0 : index
    %1 = vector.load %arg6[%c0, %c0_0] : memref<290x3xbf16, #tpu.memory_space<vmem>>, vector<17x3xbf16>
    tpu.vector_store %arg6[%c0, %c0_0], %0 {strides = array<i32>} : memref<290x3xbf16, #tpu.memory_space<vmem>>, vector<17x3xbf16>,
    %cst_1 = arith.constant 0.000000e+00 : bf16
    %2 = vector.broadcast %cst_1 : bf16 to vector<17x3xbf16>
    %c273 = arith.constant 273 : index
    %c0_2 = arith.constant 0 : index
    %3 = vector.load %arg6[%c273, %c0_2] : memref<290x3xbf16, #tpu.memory_space<vmem>>, vector<17x3xbf16>
    tpu.vector_store %arg6[%c273, %c0_2], %2 {strides = array<i32>} : memref<290x3xbf16, #tpu.memory_space<vmem>>, vector<17x3xbf16>,
    %c0_3 = arith.constant 0 : index
    %c0_4 = arith.constant 0 : index
    %c0_5 = arith.constant 0 : index
    %4 = vector.load %arg1[%c0_3, %c0_4, %c0_5] : memref<1x256x3xbf16, #tpu.memory_space<vmem>>, vector<1x256x3xbf16>
    %5 = vector.shape_cast %4 : vector<1x256x3xbf16> to vector<256x3xbf16>
    %c17 = arith.constant 17 : index
    %c0_6 = arith.constant 0 : index
    %6 = vector.load %arg6[%c17, %c0_6] : memref<290x3xbf16, #tpu.memory_space<vmem>>, vector<256x3xbf16>
    tpu.vector_store %arg6[%c17, %c0_6], %5 {strides = array<i32>} : memref<290x3xbf16, #tpu.memory_space<vmem>>, vector<256x3xbf16>,
    %c0_7 = arith.constant 0 : index
    %c0_8 = arith.constant 0 : index
    %7 = vector.load %arg3[%c0_7, %c0_8] : memref<1x16xf32, #tpu.memory_space<vmem>>, vector<1x16xf32>
    %c0_9 = arith.constant 0 : index
    %c0_10 = arith.constant 0 : index
    %8 = vector.load %arg4[%c0_9, %c0_10] : memref<1x16xf32, #tpu.memory_space<vmem>>, vector<1x16xf32>
    %c0_i32 = arith.constant 0 : i32
    %c256_i32 = arith.constant 256 : i32
    %9 = arith.muli %c0_i32, %c256_i32 : i32
    %cst_11 = arith.constant 0.000000e+00 : f32
    %10 = vector.broadcast %cst_11 : f32 to vector<256x16xf32>
    %cst_12 = arith.constant 0.000000e+00 : f32
    %11 = vector.broadcast %cst_12 : f32 to vector<256x16xf32>
    %cst_13 = arith.constant 0.000000e+00 : f32
    %12 = vector.broadcast %cst_13 : f32 to vector<256x16xf32>
    %c0_i32_14 = arith.constant 0 : i32
    %13 = arith.addi %9, %c0_i32_14 : i32
    %14 = arith.index_cast %13 : i32 to index
    %c0_15 = arith.constant 0 : index
    %15 = vector.load %arg6[%14, %c0_15] : memref<290x3xbf16, #tpu.memory_space<vmem>>, vector<258x3xbf16>
    %c0_16 = arith.constant 0 : index
    %c0_17 = arith.constant 0 : index
    %c0_18 = arith.constant 0 : index
    %16 = vector.load %arg2[%c0_16, %c0_17, %c0_18] : memref<3x3x48xbf16, #tpu.memory_space<vmem>>, vector<1x3x48xbf16>
    %17 = vector.shape_cast %16 : vector<1x3x48xbf16> to vector<3x48xbf16>
    %cst_19 = arith.constant dense<0.000000e+00> : vector<258x48xf32>
    %18 = tpu.matmul %15, %17, %cst_19 {dimension_numbers = #tpu.dot_dimension_numbers<[1], [0], [0], [1], [0, 0, 1, 1], [], []>} : vector<258x3xbf16>, vector<3x48xbf16>, vector<258x48xf32> -> vector<258x48xf32>
    %19 = vector.extract_strided_slice %18 {offsets = [0, 0], sizes = [256, 16], strides = [1, 1]} : vector<258x48xf32> to vector<256x16xf32>
    %20 = arith.addf %11, %19 : vector<256x16xf32>
    %21 = vector.extract_strided_slice %18 {offsets = [1, 16], sizes = [256, 16], strides = [1, 1]} : vector<258x48xf32> to vector<256x16xf32>
    %22 = arith.addf %10, %21 : vector<256x16xf32>
    %23 = vector.extract_strided_slice %18 {offsets = [2, 32], sizes = [256, 16], strides = [1, 1]} : vector<258x48xf32> to vector<256x16xf32>
    %24 = arith.addf %12, %23 : vector<256x16xf32>
    %c16_i32 = arith.constant 16 : i32
    %25 = arith.addi %9, %c16_i32 : i32
    %26 = arith.index_cast %25 : i32 to index
    %c0_20 = arith.constant 0 : index
    %27 = vector.load %arg6[%26, %c0_20] : memref<290x3xbf16, #tpu.memory_space<vmem>>, vector<258x3xbf16>
    %c1 = arith.constant 1 : index
    %c0_21 = arith.constant 0 : index
    %c0_22 = arith.constant 0 : index
    %28 = vector.load %arg2[%c1, %c0_21, %c0_22] : memref<3x3x48xbf16, #tpu.memory_space<vmem>>, vector<1x3x48xbf16>
    %29 = vector.shape_cast %28 : vector<1x3x48xbf16> to vector<3x48xbf16>
    %cst_23 = arith.constant dense<0.000000e+00> : vector<258x48xf32>
    %30 = tpu.matmul %27, %29, %cst_23 {dimension_numbers = #tpu.dot_dimension_numbers<[1], [0], [0], [1], [0, 0, 1, 1], [], []>} : vector<258x3xbf16>, vector<3x48xbf16>, vector<258x48xf32> -> vector<258x48xf32>
    %31 = vector.extract_strided_slice %30 {offsets = [0, 0], sizes = [256, 16], strides = [1, 1]} : vector<258x48xf32> to vector<256x16xf32>
    %32 = arith.addf %20, %31 : vector<256x16xf32>
    %33 = vector.extract_strided_slice %30 {offsets = [1, 16], sizes = [256, 16], strides = [1, 1]} : vector<258x48xf32> to vector<256x16xf32>
    %34 = arith.addf %22, %33 : vector<256x16xf32>
    %35 = vector.extract_strided_slice %30 {offsets = [2, 32], sizes = [256, 16], strides = [1, 1]} : vector<258x48xf32> to vector<256x16xf32>
    %36 = arith.addf %24, %35 : vector<256x16xf32>
    %c32_i32 = arith.constant 32 : i32
    %37 = arith.addi %9, %c32_i32 : i32
    %38 = arith.index_cast %37 : i32 to index
    %c0_24 = arith.constant 0 : index
    %39 = vector.load %arg6[%38, %c0_24] : memref<290x3xbf16, #tpu.memory_space<vmem>>, vector<258x3xbf16>
    %c2 = arith.constant 2 : index
    %c0_25 = arith.constant 0 : index
    %c0_26 = arith.constant 0 : index
    %40 = vector.load %arg2[%c2, %c0_25, %c0_26] : memref<3x3x48xbf16, #tpu.memory_space<vmem>>, vector<1x3x48xbf16>
    %41 = vector.shape_cast %40 : vector<1x3x48xbf16> to vector<3x48xbf16>
    %cst_27 = arith.constant dense<0.000000e+00> : vector<258x48xf32>
    %42 = tpu.matmul %39, %41, %cst_27 {dimension_numbers = #tpu.dot_dimension_numbers<[1], [0], [0], [1], [0, 0, 1, 1], [], []>} : vector<258x3xbf16>, vector<3x48xbf16>, vector<258x48xf32> -> vector<258x48xf32>
    %43 = vector.extract_strided_slice %42 {offsets = [0, 0], sizes = [256, 16], strides = [1, 1]} : vector<258x48xf32> to vector<256x16xf32>
    %44 = arith.addf %32, %43 : vector<256x16xf32>
    %45 = vector.extract_strided_slice %42 {offsets = [1, 16], sizes = [256, 16], strides = [1, 1]} : vector<258x48xf32> to vector<256x16xf32>
    %46 = arith.addf %34, %45 : vector<256x16xf32>
    %47 = vector.extract_strided_slice %42 {offsets = [2, 32], sizes = [256, 16], strides = [1, 1]} : vector<258x48xf32> to vector<256x16xf32>
    %48 = arith.addf %36, %47 : vector<256x16xf32>
    %49 = tpu.iota {dimensions = array<i32: 0>} : vector<256x1xi32>
    %50 = vector.broadcast %9 : i32 to vector<256x1xi32>
    %51 = arith.addi %49, %50 : vector<256x1xi32>
    %c16_i32_28 = arith.constant 16 : i32
    %c0_i32_29 = arith.constant 0 : i32
    %52 = arith.cmpi eq, %c16_i32_28, %c0_i32_29 : i32
    %c1_i32 = arith.constant 1 : i32
    %53 = arith.select %52, %c1_i32, %c16_i32_28 : i32
    %54 = vector.broadcast %53 : i32 to vector<256x1xi32>
    %55 = arith.remsi %51, %54 : vector<256x1xi32>
    %c0_i32_30 = arith.constant 0 : i32
    %56 = vector.broadcast %c0_i32_30 : i32 to vector<256x1xi32>
    %57 = arith.cmpi ne, %55, %56 : vector<256x1xi32>
    %c0_i32_31 = arith.constant 0 : i32
    %58 = vector.broadcast %c0_i32_31 : i32 to vector<256x1xi32>
    %59 = arith.cmpi slt, %55, %58 : vector<256x1xi32>
    %c0_i32_32 = arith.constant 0 : i32
    %60 = arith.cmpi slt, %53, %c0_i32_32 : i32
    %61 = vector.broadcast %60 : i1 to vector<256x1xi1>
    %62 = vector.broadcast %61 : vector<256x1xi1> to vector<256x1xi1>
    %63 = arith.xori %59, %62 : vector<256x1xi1>
    %64 = arith.andi %63, %57 : vector<256x1xi1>
    %65 = vector.broadcast %53 : i32 to vector<256x1xi32>
    %66 = arith.addi %55, %65 : vector<256x1xi32>
    %67 = arith.select %64, %66, %55 : vector<256x1xi1>, vector<256x1xi32>
    %c0_i32_33 = arith.constant 0 : i32
    %68 = vector.broadcast %c0_i32_33 : i32 to vector<256x1xi32>
    %69 = arith.cmpi sgt, %67, %68 : vector<256x1xi32>
    %70 = arith.extui %69 : vector<256x1xi1> to vector<256x1xi32>
    %71 = arith.sitofp %70 : vector<256x1xi32> to vector<256x1xf32>
    %c15_i32 = arith.constant 15 : i32
    %72 = vector.broadcast %c15_i32 : i32 to vector<256x1xi32>
    %73 = arith.cmpi slt, %67, %72 : vector<256x1xi32>
    %74 = arith.extui %73 : vector<256x1xi1> to vector<256x1xi32>
    %75 = arith.sitofp %74 : vector<256x1xi32> to vector<256x1xf32>
    %76 = vector.broadcast %71 : vector<256x1xf32> to vector<256x16xf32>
    %77 = arith.mulf %44, %76 : vector<256x16xf32>
    %78 = arith.addf %46, %77 : vector<256x16xf32>
    %79 = vector.broadcast %75 : vector<256x1xf32> to vector<256x16xf32>
    %80 = arith.mulf %48, %79 : vector<256x16xf32>
    %81 = arith.addf %78, %80 : vector<256x16xf32>
    %82 = vector.broadcast %7 : vector<1x16xf32> to vector<256x16xf32>
    %83 = arith.mulf %81, %82 : vector<256x16xf32>
    %84 = vector.broadcast %8 : vector<1x16xf32> to vector<256x16xf32>
    %85 = arith.addf %83, %84 : vector<256x16xf32>
    %cst_34 = arith.constant 0.000000e+00 : f32
    %86 = vector.broadcast %cst_34 : f32 to vector<256x16xf32>
    %87 = arith.maximumf %85, %86 : vector<256x16xf32>
    %c0_35 = arith.constant 0 : index
    %88 = arith.index_cast %9 : i32 to index
    %c0_36 = arith.constant 0 : index
    %89 = vector.load %arg5[%c0_35, %88, %c0_36] : memref<1x256x16xf32, #tpu.memory_space<vmem>>, vector<1x256x16xf32>
    %90 = vector.shape_cast %89 : vector<1x256x16xf32> to vector<256x16xf32>
    %91 = vector.shape_cast %87 : vector<256x16xf32> to vector<1x256x16xf32>
    tpu.vector_store %arg5[%c0_35, %88, %c0_36], %91 {strides = array<i32>} : memref<1x256x16xf32, #tpu.memory_space<vmem>>, vector<1x256x16xf32>,
    %c1_i32_37 = arith.constant 1 : i32
    return
  }
  func.func @transform_0(%arg0: i32) -> (i32, i32, i32) {
    %c0_i32 = arith.constant 0 : i32
    %c0_i32_0 = arith.constant 0 : i32
    %c0_i32_1 = arith.constant 0 : i32
    return %arg0, %c0_i32, %c0_i32_0 : i32, i32, i32
  }
  func.func @transform_1(%arg0: i32) -> (i32, i32, i32) {
    %c0_i32 = arith.constant 0 : i32
    %c0_i32_0 = arith.constant 0 : i32
    %c0_i32_1 = arith.constant 0 : i32
    %c0_i32_2 = arith.constant 0 : i32
    return %c0_i32, %c0_i32_0, %c0_i32_1 : i32, i32, i32
  }
  func.func @transform_2(%arg0: i32) -> (i32, i32) {
    %c0_i32 = arith.constant 0 : i32
    %c0_i32_0 = arith.constant 0 : i32
    %c0_i32_1 = arith.constant 0 : i32
    return %c0_i32, %c0_i32_0 : i32, i32
  }
  func.func @transform_3(%arg0: i32) -> (i32, i32) {
    %c0_i32 = arith.constant 0 : i32
    %c0_i32_0 = arith.constant 0 : i32
    %c0_i32_1 = arith.constant 0 : i32
    return %c0_i32, %c0_i32_0 : i32, i32
  }
  func.func @transform_4(%arg0: i32) -> (i32, i32, i32) {
    %c0_i32 = arith.constant 0 : i32
    %c0_i32_0 = arith.constant 0 : i32
    %c0_i32_1 = arith.constant 0 : i32
    return %arg0, %c0_i32, %c0_i32_0 : i32, i32, i32
  }
}

</mosaic_0001>

<llo_original>
// kernel: tpu_custom_call.1
$region0: #{tpu_custom_call.1}
  #allocation0 [shape = 'u32[]', space=smem, size = 0x4, offset = 0x4, fixed_abs, tag = 'smem constant byte address 0x4 - core index']
  #allocation1 [shape = 'u32[72,128]{1,0:T(1,128)}', space=vmem, size = 0x9000, scoped, tag = 'internal scratch']
  #allocation2 [shape = 'bf16[290,3]{1,0:T(8,128)(2,1)}', space=vmem, size = 0x12800, scoped, tag = 'scratch operand']
  %s0 = inlined_call_operand.vmem [shape: bf16[2,256,3], index: 0, kind: input, shape index: {}]
  %s1 = inlined_call_operand.vmem [shape: bf16[3,3,48], index: 1, kind: input, shape index: {}]
  %s2 = inlined_call_operand.vmem [shape: f32[1,16], index: 2, kind: input, shape index: {}]
  %s3 = inlined_call_operand.vmem [shape: f32[1,16], index: 3, kind: input, shape index: {}]
  %s4 = inlined_call_operand.vmem [shape: f32[2,256,16], index: 4, kind: output, shape index: {}]
  %s5 = sld [smem:[#allocation0]]
  $region49: #{tpu_custom_call.1} parent=0
    _
  %s7 = ssub.s32 1, %s5
  %s8 = scalar_select 0, %s7, %s5
  loop: start=0, step=1, limit=4
  $region2: #{tpu_custom_call.1} parent=0 // loop_pre_header
    _
  $region3: #{tpu_custom_call.1} parent=0 // loop_header
    %s10 = sphi 0, %s14
    %p11 = scmp.ge.s32.totalorder %s10, 4
    %s20 = sphi 0, %s22
    %s23 = sphi 0, %s20
    %s24 = sphi 0, %s23
    %s40 = sphi 0, %s24
    %s44 = sphi 0, %s44
    %s46 = sphi 0, %s44
    %s47 = sphi 0, %s46
    %s61 = sphi 0, %s47
    %s65 = sphi 0, %s65
    %s67 = sphi 0, %s65
    %s68 = sphi 0, %s67
    %s82 = sphi 0, %s68
    %s86 = sphi 0, %s86
    %s88 = sphi 0, %s86
    %s89 = sphi 0, %s88
    %s103 = sphi 0, %s89
    %s109 = sphi 0, %s111
    %s112 = sphi 0, %s109
    %s113 = sphi 0, %s112
    %s129 = sphi 0, %s113
  $region4: #{tpu_custom_call.1} parent=0 // loop_header_branch
    %13 = sbr.rel (%p11) target = $region8
  $region5: #{tpu_custom_call.1} parent=0 // loop_body
    %s15 = ssub.s32 %s10, 1
    %s16 = ssub.s32 %s10, 2
    %s17 = sadd.s32 %s10, 1
    %s18 = ssub.s32 %s10, %s17
    %p19 = scmp.eq.s32.totalorder %s18, 0
    %s21 = sadd.s32 %s20, 1
    %s22 = scalar_select %p19, %s20, %s21
    %p25 = pneg %p19
    %p26 = scmp.eq.s32.totalorder %s10, 1
    %p27 = por %p25, %p26
    %p28 = scmp.ne.s32.totalorder %s20, %s23
    %p29 = scmp.eq.s32.totalorder %s10, 0
    %p30 = por %p28, %p29
    %p31 = scmp.ne.s32.totalorder %s20, %s23
    %p32 = scmp.eq.s32.totalorder %s15, 1
    %p33 = por %p31, %p32
    %p34 = scmp.ne.s32.totalorder %s23, %s24
    %p35 = scmp.eq.s32.totalorder %s15, 0
    %p36 = por %p34, %p35
    %p37 = scmp.ne.s32.totalorder %s23, %s24
    %p38 = scmp.eq.s32.totalorder %s16, 1
    %p39 = por %p37, %p38
    %p41 = scmp.ne.s32.totalorder %s24, %s40
    %p42 = scmp.eq.s32.totalorder %s16, 0
    %p43 = por %p41, %p42
    %s45 = sadd.s32 %s44, 1
    %p48 = scmp.eq.s32.totalorder %s10, 1
    %p49 = scmp.ne.s32.totalorder %s44, %s46
    %p50 = scmp.eq.s32.totalorder %s10, 0
    %p51 = por %p49, %p50
    %p52 = scmp.ne.s32.totalorder %s44, %s46
    %p53 = scmp.eq.s32.totalorder %s15, 1
    %p54 = por %p52, %p53
    %p55 = scmp.ne.s32.totalorder %s46, %s47
    %p56 = scmp.eq.s32.totalorder %s15, 0
    %p57 = por %p55, %p56
    %p58 = scmp.ne.s32.totalorder %s46, %s47
    %p59 = scmp.eq.s32.totalorder %s16, 1
    %p60 = por %p58, %p59
    %p62 = scmp.ne.s32.totalorder %s47, %s61
    %p63 = scmp.eq.s32.totalorder %s16, 0
    %p64 = por %p62, %p63
    %s66 = sadd.s32 %s65, 1
    %p69 = scmp.eq.s32.totalorder %s10, 1
    %p70 = scmp.ne.s32.totalorder %s65, %s67
    %p71 = scmp.eq.s32.totalorder %s10, 0
    %p72 = por %p70, %p71
    %p73 = scmp.ne.s32.totalorder %s65, %s67
    %p74 = scmp.eq.s32.totalorder %s15, 1
    %p75 = por %p73, %p74
    %p76 = scmp.ne.s32.totalorder %s67, %s68
    %p77 = scmp.eq.s32.totalorder %s15, 0
    %p78 = por %p76, %p77
    %p79 = scmp.ne.s32.totalorder %s67, %s68
    %p80 = scmp.eq.s32.totalorder %s16, 1
    %p81 = por %p79, %p80
    %p83 = scmp.ne.s32.totalorder %s68, %s82
    %p84 = scmp.eq.s32.totalorder %s16, 0
    %p85 = por %p83, %p84
    %s87 = sadd.s32 %s86, 1
    %p90 = scmp.eq.s32.totalorder %s10, 1
    %p91 = scmp.ne.s32.totalorder %s86, %s88
    %p92 = scmp.eq.s32.totalorder %s10, 0
    %p93 = por %p91, %p92
    %p94 = scmp.ne.s32.totalorder %s86, %s88
    %p95 = scmp.eq.s32.totalorder %s15, 1
    %p96 = por %p94, %p95
    %p97 = scmp.ne.s32.totalorder %s88, %s89
    %p98 = scmp.eq.s32.totalorder %s15, 0
    %p99 = por %p97, %p98
    %p100 = scmp.ne.s32.totalorder %s88, %s89
    %p101 = scmp.eq.s32.totalorder %s16, 1
    %p102 = por %p100, %p101
    %p104 = scmp.ne.s32.totalorder %s89, %s103
    %p105 = scmp.eq.s32.totalorder %s16, 0
    %p106 = por %p104, %p105
    %s107 = ssub.s32 %s10, %s17
    %p108 = scmp.eq.s32.totalorder %s107, 0
    %s110 = sadd.s32 %s109, 1
    %s111 = scalar_select %p108, %s109, %s110
    %p114 = pneg %p108
    %p115 = scmp.eq.s32.totalorder %s10, 1
    %p116 = por %p114, %p115
    %p117 = scmp.ne.s32.totalorder %s109, %s112
    %p118 = scmp.eq.s32.totalorder %s10, 0
    %p119 = por %p117, %p118
    %p120 = scmp.ne.s32.totalorder %s109, %s112
    %p121 = scmp.eq.s32.totalorder %s15, 1
    %p122 = por %p120, %p121
    %p123 = scmp.ne.s32.totalorder %s112, %s113
    %p124 = scmp.eq.s32.totalorder %s15, 0
    %p125 = por %p123, %p124
    %p126 = scmp.ne.s32.totalorder %s112, %s113
    %p127 = scmp.eq.s32.totalorder %s16, 1
    %p128 = por %p126, %p127
    %p130 = scmp.ne.s32.totalorder %s113, %s129
    %p131 = scmp.eq.s32.totalorder %s16, 0
    %p132 = por %p130, %p131
    %p133 = scmp.le.s32.totalorder 1, %s10
    %p134 = scmp.lt.s32.totalorder %s10, 3
    %p135 = pnand %p133, %p134
    %p136 = pneg %p135
    // Predicated region
    $region9: #{tpu_custom_call.1} parent=5 // pred_check
      _
    $region10: #{tpu_custom_call.1} parent=5 // pred_check_branch
      %138 = sbr.rel (%p135) target = $region12
    $region11: #{tpu_custom_call.1} parent=5 // pred_region
      %s139 = ssub.s32 %s10, 1
      // Predicated region
      $region13: #{tpu_custom_call.1} parent=11 // pred_check
        %p140 = pneg %p57
      $region14: #{tpu_custom_call.1} parent=11 // pred_check_branch
        %142 = sbr.rel (%p140) target = $region16
      $region15: #{tpu_custom_call.1} parent=11 // pred_region
        _
      $region16: #{tpu_custom_call.1} parent=11 // pred_fallthru
        _
      // Predicated region
      $region17: #{tpu_custom_call.1} parent=11 // pred_check
        %p143 = pneg %p78
      $region18: #{tpu_custom_call.1} parent=11 // pred_check_branch
        %145 = sbr.rel (%p143) target = $region20
      $region19: #{tpu_custom_call.1} parent=11 // pred_region
        _
      $region20: #{tpu_custom_call.1} parent=11 // pred_fallthru
        _
      // Predicated region
      $region21: #{tpu_custom_call.1} parent=11 // pred_check
        %p146 = pneg %p99
      $region22: #{tpu_custom_call.1} parent=11 // pred_check_branch
        %148 = sbr.rel (%p146) target = $region24
      $region23: #{tpu_custom_call.1} parent=11 // pred_region
        _
      $region24: #{tpu_custom_call.1} parent=11 // pred_fallthru
        _
    $region12: #{tpu_custom_call.1} parent=5 // pred_fallthru
      _
    %p149 = scmp.lt.s32.totalorder %s10, 2
    // Predicated region
    $region25: #{tpu_custom_call.1} parent=5 // pred_check
      %p150 = pneg %p149
    $region26: #{tpu_custom_call.1} parent=5 // pred_check_branch
      %152 = sbr.rel (%p150) target = $region28
    $region27: #{tpu_custom_call.1} parent=5 // pred_region
      // Predicated region
      $region29: #{tpu_custom_call.1} parent=27 // pred_check
        %p153 = pneg %p30
      $region30: #{tpu_custom_call.1} parent=27 // pred_check_branch
        %155 = sbr.rel (%p153) target = $region32
      $region31: #{tpu_custom_call.1} parent=27 // pred_region
        %p156 = scmp.lt.s32.totalorder %s10, 1
        %s157 = scalar_select %p156, %s10, 1
        %s158 = smul.addr %s157, 32
        %s159 = smul.addr %s158, 4
        %s160 = scalar_lea.vmem %s0, %s159
      $region32: #{tpu_custom_call.1} parent=27 // pred_fallthru
        _
    $region28: #{tpu_custom_call.1} parent=5 // pred_fallthru
      _
    %p161 = scmp.le.s32.totalorder 1, %s10
    %p162 = scmp.lt.s32.totalorder %s10, 3
    %p163 = pnand %p161, %p162
    %p164 = pneg %p163
    // Predicated region
    $region33: #{tpu_custom_call.1} parent=5 // pred_check
      _
    $region34: #{tpu_custom_call.1} parent=5 // pred_check_branch
      %166 = sbr.rel (%p163) target = $region36
    $region35: #{tpu_custom_call.1} parent=5 // pred_region
      %s167 = ssub.s32 %s10, 1
      %p168 = scmp.lt.s32.totalorder %s15, 1
      %s169 = scalar_select %p168, %s15, 1
      %s170 = smul.addr %s169, 32
      %s171 = smul.addr %s170, 4
      %s172 = scalar_lea.vmem %s0, %s171
      %p173 = pneg %p36
      %p174 = pneg %p33
      %p175 = pneg %p57
      %p176 = pneg %p54
      %p177 = pneg %p78
      %p178 = pneg %p75
      %p179 = pneg %p99
      %p180 = pneg %p96
      %p181 = pneg %p125
      %p182 = pneg %p122
      %p183 = scmp.lt.s32.totalorder %s15, 1
      %s184 = scalar_select %p183, %s15, 1
      %s185 = smul.addr %s184, 32
      %s186 = smul.addr %s185, 8
      %s187 = scalar_lea.vmem %s4, %s186
      %p188 = scmp.lt.s32.totalorder %s15, 1
      %s189 = scalar_select %p188, %s15, 1
      %s190 = smul.addr %s189, 32
      %s191 = smul.addr %s190, 4
      %s192 = scalar_lea.vmem %s0, %s191
      %p193 = scmp.lt.s32.totalorder %s15, 1
      %s194 = scalar_select %p193, %s15, 1
      %s195 = smul.addr %s194, 32
      %s196 = smul.addr %s195, 8
      %s197 = scalar_lea.vmem %s4, %s196
      %vm199 = vcmask 19456
      %200 = vst.msk [vmem:[#allocation2] sm:$0xf] %vm199, 0
      %201 = vst.msk [vmem:[#allocation2 + $0x4] sm:$0xf] %vm199, 0
      %vm202 = vcmask 16384
      %vm203 = vsmask.f32 256
      %vm204 = vmand %vm202, %vm203
      %v205 = vld [vmem:[#allocation2 + $0x8] sm:$0x1]
      %v206 = vsel %vm204, 0, %v205
      %207 = vst [vmem:[#allocation2 + $0x8] sm:$0x1] %v206
      %vm208 = vcmask 19456
      %vm209 = vsmask.f32 7938
      %vm210 = vmand %vm208, %vm209
      %v211 = vld [vmem:[#allocation2 + $0x88] sm:$0xf]
      %v212 = vsel %vm210, 0, %v211
      %213 = vst [vmem:[#allocation2 + $0x88] sm:$0xf] %v212
      %214 = vst.msk [vmem:[#allocation2 + $0x8c] sm:$0xf] %vm199, 0
      %vm215 = vcmask 16384
      %216 = vst.msk [vmem:[#allocation2 + $0x90] sm:$0x1] %vm215, 0
      %v217 = vld [vmem:[%s192] sm:$0xf]
      %v218 = vld [vmem:[%s192 + $0x4] sm:$0xf]
      %v219 = vld [vmem:[%s192 + $0x8] sm:$0xf]
      %v220 = vld [vmem:[%s192 + $0xc] sm:$0xf]
      %v221 = vld [vmem:[%s192 + $0x10] sm:$0xf]
      %v222 = vld [vmem:[%s192 + $0x14] sm:$0xf]
      %v223 = vld [vmem:[%s192 + $0x18] sm:$0xf]
      %v224 = vld [vmem:[%s192 + $0x1c] sm:$0xf]
      %v225 = vld [vmem:[%s192 + $0x20] sm:$0xf]
      %v226 = vld [vmem:[%s192 + $0x24] sm:$0xf]
      %v227 = vld [vmem:[%s192 + $0x28] sm:$0xf]
      %v228 = vld [vmem:[%s192 + $0x2c] sm:$0xf]
      %v229 = vld [vmem:[%s192 + $0x30] sm:$0xf]
      %v230 = vld [vmem:[%s192 + $0x34] sm:$0xf]
      %v231 = vld [vmem:[%s192 + $0x38] sm:$0xf]
      %v232 = vld [vmem:[%s192 + $0x3c] sm:$0xf]
      %v233 = vld [vmem:[%s192 + $0x40] sm:$0xf]
      %v234 = vld [vmem:[%s192 + $0x44] sm:$0xf]
      %v235 = vld [vmem:[%s192 + $0x48] sm:$0xf]
      %v236 = vld [vmem:[%s192 + $0x4c] sm:$0xf]
      %v237 = vld [vmem:[%s192 + $0x50] sm:$0xf]
      %v238 = vld [vmem:[%s192 + $0x54] sm:$0xf]
      %v239 = vld [vmem:[%s192 + $0x58] sm:$0xf]
      %v240 = vld [vmem:[%s192 + $0x5c] sm:$0xf]
      %v241 = vld [vmem:[%s192 + $0x60] sm:$0xf]
      %v242 = vld [vmem:[%s192 + $0x64] sm:$0xf]
      %v243 = vld [vmem:[%s192 + $0x68] sm:$0xf]
      %v244 = vld [vmem:[%s192 + $0x6c] sm:$0xf]
      %v245 = vld [vmem:[%s192 + $0x70] sm:$0xf]
      %v246 = vld [vmem:[%s192 + $0x74] sm:$0xf]
      %v247 = vld [vmem:[%s192 + $0x78] sm:$0xf]
      %v248 = vld [vmem:[%s192 + $0x7c] sm:$0xf]
      %vm249 = vsmask.f32 4368
      %vm250 = vmor %vm203, %vm249
      %v252 = vshrl.u32 %v217, 16
      %v254 = vrot.slane %v252, 7
      %v255 = vshll.u32 %v217, 16
      %v257 = vor.u32 %v254, %v255
      %v258 = vrot.slane %v254, 4
      %v260 = vshrl.u32 %v218, 16
      %v262 = vrot.slane %v260, 7
      %v263 = vshll.u32 %v218, 16
      %v265 = vor.u32 %v262, %v263
      %v266 = vsel %vm250, %v258, %v265
      %v267 = vrot.slane %v262, 4
      %v269 = vshrl.u32 %v219, 16
      %v271 = vrot.slane %v269, 7
      %v272 = vshll.u32 %v219, 16
      %v274 = vor.u32 %v271, %v272
      %v275 = vsel %vm250, %v267, %v274
      %v276 = vrot.slane %v271, 4
      %v278 = vshrl.u32 %v220, 16
      %v280 = vrot.slane %v278, 7
      %v281 = vshll.u32 %v220, 16
      %v283 = vor.u32 %v280, %v281
      %v284 = vsel %vm250, %v276, %v283
      %v285 = vrot.slane %v280, 4
      %v287 = vshrl.u32 %v221, 16
      %v289 = vrot.slane %v287, 7
      %v290 = vshll.u32 %v221, 16
      %v292 = vor.u32 %v289, %v290
      %v293 = vsel %vm250, %v285, %v292
      %v294 = vrot.slane %v289, 4
      %v296 = vshrl.u32 %v222, 16
      %v298 = vrot.slane %v296, 7
      %v299 = vshll.u32 %v222, 16
      %v301 = vor.u32 %v298, %v299
      %v302 = vsel %vm250, %v294, %v301
      %v303 = vrot.slane %v298, 4
      %v305 = vshrl.u32 %v223, 16
      %v307 = vrot.slane %v305, 7
      %v308 = vshll.u32 %v223, 16
      %v310 = vor.u32 %v307, %v308
      %v311 = vsel %vm250, %v303, %v310
      %v312 = vrot.slane %v307, 4
      %v314 = vshrl.u32 %v224, 16
      %v316 = vrot.slane %v314, 7
      %v317 = vshll.u32 %v224, 16
      %v319 = vor.u32 %v316, %v317
      %v320 = vsel %vm250, %v312, %v319
      %v321 = vrot.slane %v316, 4
      %v323 = vshrl.u32 %v225, 16
      %v325 = vrot.slane %v323, 7
      %v326 = vshll.u32 %v225, 16
      %v328 = vor.u32 %v325, %v326
      %v329 = vsel %vm250, %v321, %v328
      %v330 = vrot.slane %v325, 4
      %v332 = vshrl.u32 %v226, 16
      %v334 = vrot.slane %v332, 7
      %v335 = vshll.u32 %v226, 16
      %v337 = vor.u32 %v334, %v335
      %v338 = vsel %vm250, %v330, %v337
      %v339 = vrot.slane %v334, 4
      %v341 = vshrl.u32 %v227, 16
      %v343 = vrot.slane %v341, 7
      %v344 = vshll.u32 %v227, 16
      %v346 = vor.u32 %v343, %v344
      %v347 = vsel %vm250, %v339, %v346
      %v348 = vrot.slane %v343, 4
      %v350 = vshrl.u32 %v228, 16
      %v352 = vrot.slane %v350, 7
      %v353 = vshll.u32 %v228, 16
      %v355 = vor.u32 %v352, %v353
      %v356 = vsel %vm250, %v348, %v355
      %v357 = vrot.slane %v352, 4
      %v359 = vshrl.u32 %v229, 16
      %v361 = vrot.slane %v359, 7
      %v362 = vshll.u32 %v229, 16
      %v364 = vor.u32 %v361, %v362
      %v365 = vsel %vm250, %v357, %v364
      %v366 = vrot.slane %v361, 4
      %v368 = vshrl.u32 %v230, 16
      %v370 = vrot.slane %v368, 7
      %v371 = vshll.u32 %v230, 16
      %v373 = vor.u32 %v370, %v371
      %v374 = vsel %vm250, %v366, %v373
      %v375 = vrot.slane %v370, 4
      %v377 = vshrl.u32 %v231, 16
      %v379 = vrot.slane %v377, 7
      %v380 = vshll.u32 %v231, 16
      %v382 = vor.u32 %v379, %v380
      %v383 = vsel %vm250, %v375, %v382
      %v384 = vrot.slane %v379, 4
      %v386 = vshrl.u32 %v232, 16
      %v388 = vrot.slane %v386, 7
      %v389 = vshll.u32 %v232, 16
      %v391 = vor.u32 %v388, %v389
      %v392 = vsel %vm250, %v384, %v391
      %v393 = vrot.slane %v388, 4
      %v395 = vshrl.u32 %v233, 16
      %v397 = vrot.slane %v395, 7
      %v398 = vshll.u32 %v233, 16
      %v400 = vor.u32 %v397, %v398
      %v401 = vsel %vm250, %v393, %v400
      %v402 = vrot.slane %v397, 4
      %v404 = vshrl.u32 %v234, 16
      %v406 = vrot.slane %v404, 7
      %v407 = vshll.u32 %v234, 16
      %v409 = vor.u32 %v406, %v407
      %v410 = vsel %vm250, %v402, %v409
      %v411 = vrot.slane %v406, 4
      %v413 = vshrl.u32 %v235, 16
      %v415 = vrot.slane %v413, 7
      %v416 = vshll.u32 %v235, 16
      %v418 = vor.u32 %v415, %v416
      %v419 = vsel %vm250, %v411, %v418
      %v420 = vrot.slane %v415, 4
      %v422 = vshrl.u32 %v236, 16
      %v424 = vrot.slane %v422, 7
      %v425 = vshll.u32 %v236, 16
      %v427 = vor.u32 %v424, %v425
      %v428 = vsel %vm250, %v420, %v427
      %v429 = vrot.slane %v424, 4
      %v431 = vshrl.u32 %v237, 16
      %v433 = vrot.slane %v431, 7
      %v434 = vshll.u32 %v237, 16
      %v436 = vor.u32 %v433, %v434
      %v437 = vsel %vm250, %v429, %v436
      %v438 = vrot.slane %v433, 4
      %v440 = vshrl.u32 %v238, 16
      %v442 = vrot.slane %v440, 7
      %v443 = vshll.u32 %v238, 16
      %v445 = vor.u32 %v442, %v443
      %v446 = vsel %vm250, %v438, %v445
      %v447 = vrot.slane %v442, 4
      %v449 = vshrl.u32 %v239, 16
      %v451 = vrot.slane %v449, 7
      %v452 = vshll.u32 %v239, 16
      %v454 = vor.u32 %v451, %v452
      %v455 = vsel %vm250, %v447, %v454
      %v456 = vrot.slane %v451, 4
      %v458 = vshrl.u32 %v240, 16
      %v460 = vrot.slane %v458, 7
      %v461 = vshll.u32 %v240, 16
      %v463 = vor.u32 %v460, %v461
      %v464 = vsel %vm250, %v456, %v463
      %v465 = vrot.slane %v460, 4
      %v467 = vshrl.u32 %v241, 16
      %v469 = vrot.slane %v467, 7
      %v470 = vshll.u32 %v241, 16
      %v472 = vor.u32 %v469, %v470
      %v473 = vsel %vm250, %v465, %v472
      %v474 = vrot.slane %v469, 4
      %v476 = vshrl.u32 %v242, 16
      %v478 = vrot.slane %v476, 7
      %v479 = vshll.u32 %v242, 16
      %v481 = vor.u32 %v478, %v479
      %v482 = vsel %vm250, %v474, %v481
      %v483 = vrot.slane %v478, 4
      %v485 = vshrl.u32 %v243, 16
      %v487 = vrot.slane %v485, 7
      %v488 = vshll.u32 %v243, 16
      %v490 = vor.u32 %v487, %v488
      %v491 = vsel %vm250, %v483, %v490
      %v492 = vrot.slane %v487, 4
      %v494 = vshrl.u32 %v244, 16
      %v496 = vrot.slane %v494, 7
      %v497 = vshll.u32 %v244, 16
      %v499 = vor.u32 %v496, %v497
      %v500 = vsel %vm250, %v492, %v499
      %v501 = vrot.slane %v496, 4
      %v503 = vshrl.u32 %v245, 16
      %v505 = vrot.slane %v503, 7
      %v506 = vshll.u32 %v245, 16
      %v508 = vor.u32 %v505, %v506
      %v509 = vsel %vm250, %v501, %v508
      %v510 = vrot.slane %v505, 4
      %v512 = vshrl.u32 %v246, 16
      %v514 = vrot.slane %v512, 7
      %v515 = vshll.u32 %v246, 16
      %v517 = vor.u32 %v514, %v515
      %v518 = vsel %vm250, %v510, %v517
      %v519 = vrot.slane %v514, 4
      %v521 = vshrl.u32 %v247, 16
      %v523 = vrot.slane %v521, 7
      %v524 = vshll.u32 %v247, 16
      %v526 = vor.u32 %v523, %v524
      %v527 = vsel %vm250, %v519, %v526
      %v528 = vrot.slane %v523, 4
      %v530 = vshrl.u32 %v248, 16
      %v532 = vrot.slane %v530, 7
      %v533 = vshll.u32 %v248, 16
      %v535 = vor.u32 %v532, %v533
      %v536 = vsel %vm250, %v528, %v535
      %v537 = vrot.slane %v532, 4
      %v571 = vld [vmem:[#allocation2 + $0x8] sm:$0xf]
      %v572 = vsel %vm210, %v257, %v571
      %573 = vst [vmem:[#allocation2 + $0x8] sm:$0xf] %v572
      %574 = vst.msk [vmem:[#allocation2 + $0xc] sm:$0xf] %vm199, %v266
      %575 = vst.msk [vmem:[#allocation2 + $0x10] sm:$0xf] %vm199, %v275
      %576 = vst.msk [vmem:[#allocation2 + $0x14] sm:$0xf] %vm199, %v284
      %577 = vst.msk [vmem:[#allocation2 + $0x18] sm:$0xf] %vm199, %v293
      %578 = vst.msk [vmem:[#allocation2 + $0x1c] sm:$0xf] %vm199, %v302
      %579 = vst.msk [vmem:[#allocation2 + $0x20] sm:$0xf] %vm199, %v311
      %580 = vst.msk [vmem:[#allocation2 + $0x24] sm:$0xf] %vm199, %v320
      %581 = vst.msk [vmem:[#allocation2 + $0x28] sm:$0xf] %vm199, %v329
      %582 = vst.msk [vmem:[#allocation2 + $0x2c] sm:$0xf] %vm199, %v338
      %583 = vst.msk [vmem:[#allocation2 + $0x30] sm:$0xf] %vm199, %v347
      %584 = vst.msk [vmem:[#allocation2 + $0x34] sm:$0xf] %vm199, %v356
      %585 = vst.msk [vmem:[#allocation2 + $0x38] sm:$0xf] %vm199, %v365
      %586 = vst.msk [vmem:[#allocation2 + $0x3c] sm:$0xf] %vm199, %v374
      %587 = vst.msk [vmem:[#allocation2 + $0x40] sm:$0xf] %vm199, %v383
      %588 = vst.msk [vmem:[#allocation2 + $0x44] sm:$0xf] %vm199, %v392
      %589 = vst.msk [vmem:[#allocation2 + $0x48] sm:$0xf] %vm199, %v401
      %590 = vst.msk [vmem:[#allocation2 + $0x4c] sm:$0xf] %vm199, %v410
      %591 = vst.msk [vmem:[#allocation2 + $0x50] sm:$0xf] %vm199, %v419
      %592 = vst.msk [vmem:[#allocation2 + $0x54] sm:$0xf] %vm199, %v428
      %593 = vst.msk [vmem:[#allocation2 + $0x58] sm:$0xf] %vm199, %v437
      %594 = vst.msk [vmem:[#allocation2 + $0x5c] sm:$0xf] %vm199, %v446
      %595 = vst.msk [vmem:[#allocation2 + $0x60] sm:$0xf] %vm199, %v455
      %596 = vst.msk [vmem:[#allocation2 + $0x64] sm:$0xf] %vm199, %v464
      %597 = vst.msk [vmem:[#allocation2 + $0x68] sm:$0xf] %vm199, %v473
      %598 = vst.msk [vmem:[#allocation2 + $0x6c] sm:$0xf] %vm199, %v482
      %599 = vst.msk [vmem:[#allocation2 + $0x70] sm:$0xf] %vm199, %v491
      %600 = vst.msk [vmem:[#allocation2 + $0x74] sm:$0xf] %vm199, %v500
      %601 = vst.msk [vmem:[#allocation2 + $0x78] sm:$0xf] %vm199, %v509
      %602 = vst.msk [vmem:[#allocation2 + $0x7c] sm:$0xf] %vm199, %v518
      %603 = vst.msk [vmem:[#allocation2 + $0x80] sm:$0xf] %vm199, %v527
      %604 = vst.msk [vmem:[#allocation2 + $0x84] sm:$0xf] %vm199, %v536
      %v605 = vld [vmem:[#allocation2 + $0x88] sm:$0x1]
      %v606 = vsel %vm204, %v537, %v605
      %607 = vst [vmem:[#allocation2 + $0x88] sm:$0x1] %v606
      %v608 = vld [vmem:[%s2] sm:$0x1]
      %v609 = vld [vmem:[%s3] sm:$0x1]
      %v610 = vld [vmem:[#allocation2] sm:$0xf]
      %v611 = vld [vmem:[#allocation2 + $0x4] sm:$0xf]
      %v612 = vld [vmem:[#allocation2 + $0x8] sm:$0xf]
      %v613 = vld [vmem:[#allocation2 + $0xc] sm:$0xf]
      %v614 = vld [vmem:[#allocation2 + $0x10] sm:$0xf]
      %v615 = vld [vmem:[#allocation2 + $0x14] sm:$0xf]
      %v616 = vld [vmem:[#allocation2 + $0x18] sm:$0xf]
      %v617 = vld [vmem:[#allocation2 + $0x1c] sm:$0xf]
      %v618 = vld [vmem:[#allocation2 + $0x20] sm:$0xf]
      %v619 = vld [vmem:[#allocation2 + $0x24] sm:$0xf]
      %v620 = vld [vmem:[#allocation2 + $0x28] sm:$0xf]
      %v621 = vld [vmem:[#allocation2 + $0x2c] sm:$0xf]
      %v622 = vld [vmem:[#allocation2 + $0x30] sm:$0xf]
      %v623 = vld [vmem:[#allocation2 + $0x34] sm:$0xf]
      %v624 = vld [vmem:[#allocation2 + $0x38] sm:$0xf]
      %v625 = vld [vmem:[#allocation2 + $0x3c] sm:$0xf]
      %v626 = vld [vmem:[#allocation2 + $0x40] sm:$0xf]
      %v627 = vld [vmem:[#allocation2 + $0x44] sm:$0xf]
      %v628 = vld [vmem:[#allocation2 + $0x48] sm:$0xf]
      %v629 = vld [vmem:[#allocation2 + $0x4c] sm:$0xf]
      %v630 = vld [vmem:[#allocation2 + $0x50] sm:$0xf]
      %v631 = vld [vmem:[#allocation2 + $0x54] sm:$0xf]
      %v632 = vld [vmem:[#allocation2 + $0x58] sm:$0xf]
      %v633 = vld [vmem:[#allocation2 + $0x5c] sm:$0xf]
      %v634 = vld [vmem:[#allocation2 + $0x60] sm:$0xf]
      %v635 = vld [vmem:[#allocation2 + $0x64] sm:$0xf]
      %v636 = vld [vmem:[#allocation2 + $0x68] sm:$0xf]
      %v637 = vld [vmem:[#allocation2 + $0x6c] sm:$0xf]
      %v638 = vld [vmem:[#allocation2 + $0x70] sm:$0xf]
      %v639 = vld [vmem:[#allocation2 + $0x74] sm:$0xf]
      %v640 = vld [vmem:[#allocation2 + $0x78] sm:$0xf]
      %v641 = vld [vmem:[#allocation2 + $0x7c] sm:$0xf]
      %v642 = vld [vmem:[#allocation2 + $0x80] sm:$0x1]
      %v643 = vld [vmem:[%s1] sm:$0x3]
      %v677 = vunpack.c.l.b16 %v610
      %v678 = vunpack.c.l.b16 %v611
      %v679 = vunpack.c.l.b16 %v612
      %v680 = vunpack.c.l.b16 %v613
      %v681 = vunpack.c.l.b16 %v614
      %v682 = vunpack.c.l.b16 %v615
      %v683 = vunpack.c.l.b16 %v616
      %v684 = vunpack.c.l.b16 %v617
      %v685 = vunpack.c.l.b16 %v618
      %v686 = vunpack.c.l.b16 %v619
      %v687 = vunpack.c.l.b16 %v620
      %v688 = vunpack.c.l.b16 %v621
      %v689 = vunpack.c.l.b16 %v622
      %v690 = vunpack.c.l.b16 %v623
      %v691 = vunpack.c.l.b16 %v624
      %v692 = vunpack.c.l.b16 %v625
      %v693 = vunpack.c.l.b16 %v626
      %v694 = vunpack.c.l.b16 %v627
      %v695 = vunpack.c.l.b16 %v628
      %v696 = vunpack.c.l.b16 %v629
      %v697 = vunpack.c.l.b16 %v630
      %v698 = vunpack.c.l.b16 %v631
      %v699 = vunpack.c.l.b16 %v632
      %v700 = vunpack.c.l.b16 %v633
      %v701 = vunpack.c.l.b16 %v634
      %v702 = vunpack.c.l.b16 %v635
      %v703 = vunpack.c.l.b16 %v636
      %v704 = vunpack.c.l.b16 %v637
      %v705 = vunpack.c.l.b16 %v638
      %v706 = vunpack.c.l.b16 %v639
      %v707 = vunpack.c.l.b16 %v640
      %v708 = vunpack.c.l.b16 %v641
      %v709 = vunpack.c.l.b16 %v642
      %v710 = vpack.c.b16 %v678, %v677
      %v711 = vpack.c.b16 %v680, %v679
      %v712 = vpack.c.b16 %v682, %v681
      %v713 = vpack.c.b16 %v684, %v683
      %v714 = vpack.c.b16 %v686, %v685
      %v715 = vpack.c.b16 %v688, %v687
      %v716 = vpack.c.b16 %v690, %v689
      %v717 = vpack.c.b16 %v692, %v691
      %v718 = vpack.c.b16 %v694, %v693
      %v719 = vpack.c.b16 %v696, %v695
      %v720 = vpack.c.b16 %v698, %v697
      %v721 = vpack.c.b16 %v700, %v699
      %v722 = vpack.c.b16 %v702, %v701
      %v723 = vpack.c.b16 %v704, %v703
      %v724 = vpack.c.b16 %v706, %v705
      %v725 = vpack.c.b16 %v708, %v707
      %v726 = vpack.c.b16 %v709, %v709
      %vm727 = vcmask 23552
      %v729 = vsel %vm727, %v710, 0
      %v732 = vsel %vm727, %v711, 0
      %v735 = vsel %vm727, %v712, 0
      %v738 = vsel %vm727, %v713, 0
      %v741 = vsel %vm727, %v714, 0
      %v744 = vsel %vm727, %v715, 0
      %v747 = vsel %vm727, %v716, 0
      %v750 = vsel %vm727, %v717, 0
      %v753 = vsel %vm727, %v718, 0
      %v756 = vsel %vm727, %v719, 0
      %v759 = vsel %vm727, %v720, 0
      %v762 = vsel %vm727, %v721, 0
      %v765 = vsel %vm727, %v722, 0
      %v768 = vsel %vm727, %v723, 0
      %v771 = vsel %vm727, %v724, 0
      %v774 = vsel %vm727, %v725, 0
      %v777 = vsel %vm727, %v726, 0
      %vm779 = vcmask 1040384
      %vm780 = vcmask 1041408
      %v781 = vsel %vm779, 4294967295, 65535
      %v782 = vsel %vm780, %v781, 0
      %v784 = vand.u32 %v643, %v782
      %786 = vmatpush.bf16.msra.mxu0 0
      %787 = vmatpush.bf16.msra.mxu0 0
      %788 = vmatpush.bf16.msra.mxu0 0
      %789 = vmatpush.bf16.msra.mxu0 0
      %790 = vmatpush.bf16.msra.mxu0 0
      %791 = vmatpush.bf16.msra.mxu0 0
      %792 = vmatpush.bf16.msra.mxu0 0
      %793 = vmatpush.bf16.msra.mxu0 %v784
      %794 = vmatmul.bf16.gmra.mxu0 %v729
      %v795 = vpop.f32.mrf.mxu0
      %v796 = vadd.f32 0.0, %v795
      %v797 = vpop.f32.mrf.mxu0
      %v798 = vadd.f32 0.0, %v797
      %799 = vmatmul.bf16.gmra.mxu0 %v732
      %v800 = vpop.f32.mrf.mxu0
      %v801 = vadd.f32 0.0, %v800
      %v802 = vpop.f32.mrf.mxu0
      %v803 = vadd.f32 0.0, %v802
      %804 = vmatmul.bf16.gmra.mxu0 %v735
      %v805 = vpop.f32.mrf.mxu0
      %v806 = vadd.f32 0.0, %v805
      %v807 = vpop.f32.mrf.mxu0
      %v808 = vadd.f32 0.0, %v807
      %809 = vmatmul.bf16.gmra.mxu0 %v738
      %v810 = vpop.f32.mrf.mxu0
      %v811 = vadd.f32 0.0, %v810
      %v812 = vpop.f32.mrf.mxu0
      %v813 = vadd.f32 0.0, %v812
      %814 = vmatmul.bf16.gmra.mxu0 %v741
      %v815 = vpop.f32.mrf.mxu0
      %v816 = vadd.f32 0.0, %v815
      %v817 = vpop.f32.mrf.mxu0
      %v818 = vadd.f32 0.0, %v817
      %819 = vmatmul.bf16.gmra.mxu0 %v744
      %v820 = vpop.f32.mrf.mxu0
      %v821 = vadd.f32 0.0, %v820
      %v822 = vpop.f32.mrf.mxu0
      %v823 = vadd.f32 0.0, %v822
      %824 = vmatmul.bf16.gmra.mxu0 %v747
      %v825 = vpop.f32.mrf.mxu0
      %v826 = vadd.f32 0.0, %v825
      %v827 = vpop.f32.mrf.mxu0
      %v828 = vadd.f32 0.0, %v827
      %829 = vmatmul.bf16.gmra.mxu0 %v750
      %v830 = vpop.f32.mrf.mxu0
      %v831 = vadd.f32 0.0, %v830
      %v832 = vpop.f32.mrf.mxu0
      %v833 = vadd.f32 0.0, %v832
      %834 = vmatmul.bf16.gmra.mxu0 %v753
      %v835 = vpop.f32.mrf.mxu0
      %v836 = vadd.f32 0.0, %v835
      %v837 = vpop.f32.mrf.mxu0
      %v838 = vadd.f32 0.0, %v837
      %839 = vmatmul.bf16.gmra.mxu0 %v756
      %v840 = vpop.f32.mrf.mxu0
      %v841 = vadd.f32 0.0, %v840
      %v842 = vpop.f32.mrf.mxu0
      %v843 = vadd.f32 0.0, %v842
      %844 = vmatmul.bf16.gmra.mxu0 %v759
      %v845 = vpop.f32.mrf.mxu0
      %v846 = vadd.f32 0.0, %v845
      %v847 = vpop.f32.mrf.mxu0
      %v848 = vadd.f32 0.0, %v847
      %849 = vmatmul.bf16.gmra.mxu0 %v762
      %v850 = vpop.f32.mrf.mxu0
      %v851 = vadd.f32 0.0, %v850
      %v852 = vpop.f32.mrf.mxu0
      %v853 = vadd.f32 0.0, %v852
      %854 = vmatmul.bf16.gmra.mxu0 %v765
      %v855 = vpop.f32.mrf.mxu0
      %v856 = vadd.f32 0.0, %v855
      %v857 = vpop.f32.mrf.mxu0
      %v858 = vadd.f32 0.0, %v857
      %859 = vmatmul.bf16.gmra.mxu0 %v768
      %v860 = vpop.f32.mrf.mxu0
      %v861 = vadd.f32 0.0, %v860
      %v862 = vpop.f32.mrf.mxu0
      %v863 = vadd.f32 0.0, %v862
      %864 = vmatmul.bf16.gmra.mxu0 %v771
      %v865 = vpop.f32.mrf.mxu0
      %v866 = vadd.f32 0.0, %v865
      %v867 = vpop.f32.mrf.mxu0
      %v868 = vadd.f32 0.0, %v867
      %869 = vmatmul.bf16.gmra.mxu0 %v774
      %v870 = vpop.f32.mrf.mxu0
      %v871 = vadd.f32 0.0, %v870
      %v872 = vpop.f32.mrf.mxu0
      %v873 = vadd.f32 0.0, %v872
      %874 = vmatmul.bf16.gmra.mxu0 %v777
      %v875 = vpop.f32.mrf.mxu0
      %v876 = vadd.f32 0.0, %v875
      %v877 = vpop.f32.mrf.mxu0
      %878 = vdwg.mxu0
      %v879 = vadd.f32 %v796, 0.0
      %v880 = vadd.f32 %v798, 0.0
      %v881 = vadd.f32 %v801, 0.0
      %v882 = vadd.f32 %v803, 0.0
      %v883 = vadd.f32 %v806, 0.0
      %v884 = vadd.f32 %v808, 0.0
      %v885 = vadd.f32 %v811, 0.0
      %v886 = vadd.f32 %v813, 0.0
      %v887 = vadd.f32 %v816, 0.0
      %v888 = vadd.f32 %v818, 0.0
      %v889 = vadd.f32 %v821, 0.0
      %v890 = vadd.f32 %v823, 0.0
      %v891 = vadd.f32 %v826, 0.0
      %v892 = vadd.f32 %v828, 0.0
      %v893 = vadd.f32 %v831, 0.0
      %v894 = vadd.f32 %v833, 0.0
      %v895 = vadd.f32 %v836, 0.0
      %v896 = vadd.f32 %v838, 0.0
      %v897 = vadd.f32 %v841, 0.0
      %v898 = vadd.f32 %v843, 0.0
      %v899 = vadd.f32 %v846, 0.0
      %v900 = vadd.f32 %v848, 0.0
      %v901 = vadd.f32 %v851, 0.0
      %v902 = vadd.f32 %v853, 0.0
      %v903 = vadd.f32 %v856, 0.0
      %v904 = vadd.f32 %v858, 0.0
      %v905 = vadd.f32 %v861, 0.0
      %v906 = vadd.f32 %v863, 0.0
      %v907 = vadd.f32 %v866, 0.0
      %v908 = vadd.f32 %v868, 0.0
      %v909 = vadd.f32 %v871, 0.0
      %v910 = vadd.f32 %v873, 0.0
      %v911 = vadd.f32 %v876, 0.0
      %v912 = vld [vmem:[#allocation2 + $0x8] sm:$0xf]
      %v913 = vld [vmem:[#allocation2 + $0xc] sm:$0xf]
      %v914 = vld [vmem:[#allocation2 + $0x10] sm:$0xf]
      %v915 = vld [vmem:[#allocation2 + $0x14] sm:$0xf]
      %v916 = vld [vmem:[#allocation2 + $0x18] sm:$0xf]
      %v917 = vld [vmem:[#allocation2 + $0x1c] sm:$0xf]
      %v918 = vld [vmem:[#allocation2 + $0x20] sm:$0xf]
      %v919 = vld [vmem:[#allocation2 + $0x24] sm:$0xf]
      %v920 = vld [vmem:[#allocation2 + $0x28] sm:$0xf]
      %v921 = vld [vmem:[#allocation2 + $0x2c] sm:$0xf]
      %v922 = vld [vmem:[#allocation2 + $0x30] sm:$0xf]
      %v923 = vld [vmem:[#allocation2 + $0x34] sm:$0xf]
      %v924 = vld [vmem:[#allocation2 + $0x38] sm:$0xf]
      %v925 = vld [vmem:[#allocation2 + $0x3c] sm:$0xf]
      %v926 = vld [vmem:[#allocation2 + $0x40] sm:$0xf]
      %v927 = vld [vmem:[#allocation2 + $0x44] sm:$0xf]
      %v928 = vld [vmem:[#allocation2 + $0x48] sm:$0xf]
      %v929 = vld [vmem:[#allocation2 + $0x4c] sm:$0xf]
      %v930 = vld [vmem:[#allocation2 + $0x50] sm:$0xf]
      %v931 = vld [vmem:[#allocation2 + $0x54] sm:$0xf]
      %v932 = vld [vmem:[#allocation2 + $0x58] sm:$0xf]
      %v933 = vld [vmem:[#allocation2 + $0x5c] sm:$0xf]
      %v934 = vld [vmem:[#allocation2 + $0x60] sm:$0xf]
      %v935 = vld [vmem:[#allocation2 + $0x64] sm:$0xf]
      %v936 = vld [vmem:[#allocation2 + $0x68] sm:$0xf]
      %v937 = vld [vmem:[#allocation2 + $0x6c] sm:$0xf]
      %v938 = vld [vmem:[#allocation2 + $0x70] sm:$0xf]
      %v939 = vld [vmem:[#allocation2 + $0x74] sm:$0xf]
      %v940 = vld [vmem:[#allocation2 + $0x78] sm:$0xf]
      %v941 = vld [vmem:[#allocation2 + $0x7c] sm:$0xf]
      %v942 = vld [vmem:[#allocation2 + $0x80] sm:$0xf]
      %v943 = vld [vmem:[#allocation2 + $0x84] sm:$0xf]
      %v944 = vld [vmem:[#allocation2 + $0x88] sm:$0x1]
      %s945 = scalar_lea.vmem %s1, 2
      %v946 = vld [vmem:[%s945] sm:$0x3]
      %v980 = vunpack.c.l.b16 %v912
      %v981 = vunpack.c.l.b16 %v913
      %v982 = vunpack.c.l.b16 %v914
      %v983 = vunpack.c.l.b16 %v915
      %v984 = vunpack.c.l.b16 %v916
      %v985 = vunpack.c.l.b16 %v917
      %v986 = vunpack.c.l.b16 %v918
      %v987 = vunpack.c.l.b16 %v919
      %v988 = vunpack.c.l.b16 %v920
      %v989 = vunpack.c.l.b16 %v921
      %v990 = vunpack.c.l.b16 %v922
      %v991 = vunpack.c.l.b16 %v923
      %v992 = vunpack.c.l.b16 %v924
      %v993 = vunpack.c.l.b16 %v925
      %v994 = vunpack.c.l.b16 %v926
      %v995 = vunpack.c.l.b16 %v927
      %v996 = vunpack.c.l.b16 %v928
      %v997 = vunpack.c.l.b16 %v929
      %v998 = vunpack.c.l.b16 %v930
      %v999 = vunpack.c.l.b16 %v931
      %v1000 = vunpack.c.l.b16 %v932
      %v1001 = vunpack.c.l.b16 %v933
      %v1002 = vunpack.c.l.b16 %v934
      %v1003 = vunpack.c.l.b16 %v935
      %v1004 = vunpack.c.l.b16 %v936
      %v1005 = vunpack.c.l.b16 %v937
      %v1006 = vunpack.c.l.b16 %v938
      %v1007 = vunpack.c.l.b16 %v939
      %v1008 = vunpack.c.l.b16 %v940
      %v1009 = vunpack.c.l.b16 %v941
      %v1010 = vunpack.c.l.b16 %v942
      %v1011 = vunpack.c.l.b16 %v943
      %v1012 = vunpack.c.l.b16 %v944
      %v1013 = vpack.c.b16 %v981, %v980
      %v1014 = vpack.c.b16 %v983, %v982
      %v1015 = vpack.c.b16 %v985, %v984
      %v1016 = vpack.c.b16 %v987, %v986
      %v1017 = vpack.c.b16 %v989, %v988
      %v1018 = vpack.c.b16 %v991, %v990
      %v1019 = vpack.c.b16 %v993, %v992
      %v1020 = vpack.c.b16 %v995, %v994
      %v1021 = vpack.c.b16 %v997, %v996
      %v1022 = vpack.c.b16 %v999, %v998
      %v1023 = vpack.c.b16 %v1001, %v1000
      %v1024 = vpack.c.b16 %v1003, %v1002
      %v1025 = vpack.c.b16 %v1005, %v1004
      %v1026 = vpack.c.b16 %v1007, %v1006
      %v1027 = vpack.c.b16 %v1009, %v1008
      %v1028 = vpack.c.b16 %v1011, %v1010
      %v1029 = vpack.c.b16 %v1012, %v1012
      %v1031 = vsel %vm727, %v1013, 0
      %v1034 = vsel %vm727, %v1014, 0
      %v1037 = vsel %vm727, %v1015, 0
      %v1040 = vsel %vm727, %v1016, 0
      %v1043 = vsel %vm727, %v1017, 0
      %v1046 = vsel %vm727, %v1018, 0
      %v1049 = vsel %vm727, %v1019, 0
      %v1052 = vsel %vm727, %v1020, 0
      %v1055 = vsel %vm727, %v1021, 0
      %v1058 = vsel %vm727, %v1022, 0
      %v1061 = vsel %vm727, %v1023, 0
      %v1064 = vsel %vm727, %v1024, 0
      %v1067 = vsel %vm727, %v1025, 0
      %v1070 = vsel %vm727, %v1026, 0
      %v1073 = vsel %vm727, %v1027, 0
      %v1076 = vsel %vm727, %v1028, 0
      %v1079 = vsel %vm727, %v1029, 0
      %v1082 = vand.u32 %v946, %v782
      %1084 = vmatpush.bf16.msra.mxu0 0
      %1085 = vmatpush.bf16.msra.mxu0 0
      %1086 = vmatpush.bf16.msra.mxu0 0
      %1087 = vmatpush.bf16.msra.mxu0 0
      %1088 = vmatpush.bf16.msra.mxu0 0
      %1089 = vmatpush.bf16.msra.mxu0 0
      %1090 = vmatpush.bf16.msra.mxu0 0
      %1091 = vmatpush.bf16.msra.mxu0 %v1082
      %1092 = vmatmul.bf16.gmra.mxu0 %v1031
      %v1093 = vpop.f32.mrf.mxu0
      %v1094 = vadd.f32 0.0, %v1093
      %v1095 = vpop.f32.mrf.mxu0
      %v1096 = vadd.f32 0.0, %v1095
      %1097 = vmatmul.bf16.gmra.mxu0 %v1034
      %v1098 = vpop.f32.mrf.mxu0
      %v1099 = vadd.f32 0.0, %v1098
      %v1100 = vpop.f32.mrf.mxu0
      %v1101 = vadd.f32 0.0, %v1100
      %1102 = vmatmul.bf16.gmra.mxu0 %v1037
      %v1103 = vpop.f32.mrf.mxu0
      %v1104 = vadd.f32 0.0, %v1103
      %v1105 = vpop.f32.mrf.mxu0
      %v1106 = vadd.f32 0.0, %v1105
      %1107 = vmatmul.bf16.gmra.mxu0 %v1040
      %v1108 = vpop.f32.mrf.mxu0
      %v1109 = vadd.f32 0.0, %v1108
      %v1110 = vpop.f32.mrf.mxu0
      %v1111 = vadd.f32 0.0, %v1110
      %1112 = vmatmul.bf16.gmra.mxu0 %v1043
      %v1113 = vpop.f32.mrf.mxu0
      %v1114 = vadd.f32 0.0, %v1113
      %v1115 = vpop.f32.mrf.mxu0
      %v1116 = vadd.f32 0.0, %v1115
      %1117 = vmatmul.bf16.gmra.mxu0 %v1046
      %v1118 = vpop.f32.mrf.mxu0
      %v1119 = vadd.f32 0.0, %v1118
      %v1120 = vpop.f32.mrf.mxu0
      %v1121 = vadd.f32 0.0, %v1120
      %1122 = vmatmul.bf16.gmra.mxu0 %v1049
      %v1123 = vpop.f32.mrf.mxu0
      %v1124 = vadd.f32 0.0, %v1123
      %v1125 = vpop.f32.mrf.mxu0
      %v1126 = vadd.f32 0.0, %v1125
      %1127 = vmatmul.bf16.gmra.mxu0 %v1052
      %v1128 = vpop.f32.mrf.mxu0
      %v1129 = vadd.f32 0.0, %v1128
      %v1130 = vpop.f32.mrf.mxu0
      %v1131 = vadd.f32 0.0, %v1130
      %1132 = vmatmul.bf16.gmra.mxu0 %v1055
      %v1133 = vpop.f32.mrf.mxu0
      %v1134 = vadd.f32 0.0, %v1133
      %v1135 = vpop.f32.mrf.mxu0
      %v1136 = vadd.f32 0.0, %v1135
      %1137 = vmatmul.bf16.gmra.mxu0 %v1058
      %v1138 = vpop.f32.mrf.mxu0
      %v1139 = vadd.f32 0.0, %v1138
      %v1140 = vpop.f32.mrf.mxu0
      %v1141 = vadd.f32 0.0, %v1140
      %1142 = vmatmul.bf16.gmra.mxu0 %v1061
      %v1143 = vpop.f32.mrf.mxu0
      %v1144 = vadd.f32 0.0, %v1143
      %v1145 = vpop.f32.mrf.mxu0
      %v1146 = vadd.f32 0.0, %v1145
      %1147 = vmatmul.bf16.gmra.mxu0 %v1064
      %v1148 = vpop.f32.mrf.mxu0
      %v1149 = vadd.f32 0.0, %v1148
      %v1150 = vpop.f32.mrf.mxu0
      %v1151 = vadd.f32 0.0, %v1150
      %1152 = vmatmul.bf16.gmra.mxu0 %v1067
      %v1153 = vpop.f32.mrf.mxu0
      %v1154 = vadd.f32 0.0, %v1153
      %v1155 = vpop.f32.mrf.mxu0
      %v1156 = vadd.f32 0.0, %v1155
      %1157 = vmatmul.bf16.gmra.mxu0 %v1070
      %v1158 = vpop.f32.mrf.mxu0
      %v1159 = vadd.f32 0.0, %v1158
      %v1160 = vpop.f32.mrf.mxu0
      %v1161 = vadd.f32 0.0, %v1160
      %1162 = vmatmul.bf16.gmra.mxu0 %v1073
      %v1163 = vpop.f32.mrf.mxu0
      %v1164 = vadd.f32 0.0, %v1163
      %v1165 = vpop.f32.mrf.mxu0
      %v1166 = vadd.f32 0.0, %v1165
      %1167 = vmatmul.bf16.gmra.mxu0 %v1076
      %v1168 = vpop.f32.mrf.mxu0
      %v1169 = vadd.f32 0.0, %v1168
      %v1170 = vpop.f32.mrf.mxu0
      %v1171 = vadd.f32 0.0, %v1170
      %1172 = vmatmul.bf16.gmra.mxu0 %v1079
      %v1173 = vpop.f32.mrf.mxu0
      %v1174 = vadd.f32 0.0, %v1173
      %v1175 = vpop.f32.mrf.mxu0
      %1176 = vdwg.mxu0
      %v1177 = vadd.f32 %v879, %v1094
      %v1178 = vadd.f32 %v880, %v1096
      %v1179 = vadd.f32 %v881, %v1099
      %v1180 = vadd.f32 %v882, %v1101
      %v1181 = vadd.f32 %v883, %v1104
      %v1182 = vadd.f32 %v884, %v1106
      %v1183 = vadd.f32 %v885, %v1109
      %v1184 = vadd.f32 %v886, %v1111
      %v1185 = vadd.f32 %v887, %v1114
      %v1186 = vadd.f32 %v888, %v1116
      %v1187 = vadd.f32 %v889, %v1119
      %v1188 = vadd.f32 %v890, %v1121
      %v1189 = vadd.f32 %v891, %v1124
      %v1190 = vadd.f32 %v892, %v1126
      %v1191 = vadd.f32 %v893, %v1129
      %v1192 = vadd.f32 %v894, %v1131
      %v1193 = vadd.f32 %v895, %v1134
      %v1194 = vadd.f32 %v896, %v1136
      %v1195 = vadd.f32 %v897, %v1139
      %v1196 = vadd.f32 %v898, %v1141
      %v1197 = vadd.f32 %v899, %v1144
      %v1198 = vadd.f32 %v900, %v1146
      %v1199 = vadd.f32 %v901, %v1149
      %v1200 = vadd.f32 %v902, %v1151
      %v1201 = vadd.f32 %v903, %v1154
      %v1202 = vadd.f32 %v904, %v1156
      %v1203 = vadd.f32 %v905, %v1159
      %v1204 = vadd.f32 %v906, %v1161
      %v1205 = vadd.f32 %v907, %v1164
      %v1206 = vadd.f32 %v908, %v1166
      %v1207 = vadd.f32 %v909, %v1169
      %v1208 = vadd.f32 %v910, %v1171
      %v1209 = vadd.f32 %v911, %v1174
      %v1210 = vld [vmem:[#allocation2 + $0x10] sm:$0xf]
      %v1211 = vld [vmem:[#allocation2 + $0x14] sm:$0xf]
      %v1212 = vld [vmem:[#allocation2 + $0x18] sm:$0xf]
      %v1213 = vld [vmem:[#allocation2 + $0x1c] sm:$0xf]
      %v1214 = vld [vmem:[#allocation2 + $0x20] sm:$0xf]
      %v1215 = vld [vmem:[#allocation2 + $0x24] sm:$0xf]
      %v1216 = vld [vmem:[#allocation2 + $0x28] sm:$0xf]
      %v1217 = vld [vmem:[#allocation2 + $0x2c] sm:$0xf]
      %v1218 = vld [vmem:[#allocation2 + $0x30] sm:$0xf]
      %v1219 = vld [vmem:[#allocation2 + $0x34] sm:$0xf]
      %v1220 = vld [vmem:[#allocation2 + $0x38] sm:$0xf]
      %v1221 = vld [vmem:[#allocation2 + $0x3c] sm:$0xf]
      %v1222 = vld [vmem:[#allocation2 + $0x40] sm:$0xf]
      %v1223 = vld [vmem:[#allocation2 + $0x44] sm:$0xf]
      %v1224 = vld [vmem:[#allocation2 + $0x48] sm:$0xf]
      %v1225 = vld [vmem:[#allocation2 + $0x4c] sm:$0xf]
      %v1226 = vld [vmem:[#allocation2 + $0x50] sm:$0xf]
      %v1227 = vld [vmem:[#allocation2 + $0x54] sm:$0xf]
      %v1228 = vld [vmem:[#allocation2 + $0x58] sm:$0xf]
      %v1229 = vld [vmem:[#allocation2 + $0x5c] sm:$0xf]
      %v1230 = vld [vmem:[#allocation2 + $0x60] sm:$0xf]
      %v1231 = vld [vmem:[#allocation2 + $0x64] sm:$0xf]
      %v1232 = vld [vmem:[#allocation2 + $0x68] sm:$0xf]
      %v1233 = vld [vmem:[#allocation2 + $0x6c] sm:$0xf]
      %v1234 = vld [vmem:[#allocation2 + $0x70] sm:$0xf]
      %v1235 = vld [vmem:[#allocation2 + $0x74] sm:$0xf]
      %v1236 = vld [vmem:[#allocation2 + $0x78] sm:$0xf]
      %v1237 = vld [vmem:[#allocation2 + $0x7c] sm:$0xf]
      %v1238 = vld [vmem:[#allocation2 + $0x80] sm:$0xf]
      %v1239 = vld [vmem:[#allocation2 + $0x84] sm:$0xf]
      %v1240 = vld [vmem:[#allocation2 + $0x88] sm:$0xf]
      %v1241 = vld [vmem:[#allocation2 + $0x8c] sm:$0xf]
      %v1242 = vld [vmem:[#allocation2 + $0x90] sm:$0x1]
      %s1243 = scalar_lea.vmem %s1, 4
      %v1244 = vld [vmem:[%s1243] sm:$0x3]
      %v1278 = vunpack.c.l.b16 %v1210
      %v1279 = vunpack.c.l.b16 %v1211
      %v1280 = vunpack.c.l.b16 %v1212
      %v1281 = vunpack.c.l.b16 %v1213
      %v1282 = vunpack.c.l.b16 %v1214
      %v1283 = vunpack.c.l.b16 %v1215
      %v1284 = vunpack.c.l.b16 %v1216
      %v1285 = vunpack.c.l.b16 %v1217
      %v1286 = vunpack.c.l.b16 %v1218
      %v1287 = vunpack.c.l.b16 %v1219
      %v1288 = vunpack.c.l.b16 %v1220
      %v1289 = vunpack.c.l.b16 %v1221
      %v1290 = vunpack.c.l.b16 %v1222
      %v1291 = vunpack.c.l.b16 %v1223
      %v1292 = vunpack.c.l.b16 %v1224
      %v1293 = vunpack.c.l.b16 %v1225
      %v1294 = vunpack.c.l.b16 %v1226
      %v1295 = vunpack.c.l.b16 %v1227
      %v1296 = vunpack.c.l.b16 %v1228
      %v1297 = vunpack.c.l.b16 %v1229
      %v1298 = vunpack.c.l.b16 %v1230
      %v1299 = vunpack.c.l.b16 %v1231
      %v1300 = vunpack.c.l.b16 %v1232
      %v1301 = vunpack.c.l.b16 %v1233
      %v1302 = vunpack.c.l.b16 %v1234
      %v1303 = vunpack.c.l.b16 %v1235
      %v1304 = vunpack.c.l.b16 %v1236
      %v1305 = vunpack.c.l.b16 %v1237
      %v1306 = vunpack.c.l.b16 %v1238
      %v1307 = vunpack.c.l.b16 %v1239
      %v1308 = vunpack.c.l.b16 %v1240
      %v1309 = vunpack.c.l.b16 %v1241
      %v1310 = vunpack.c.l.b16 %v1242
      %v1311 = vpack.c.b16 %v1279, %v1278
      %v1312 = vpack.c.b16 %v1281, %v1280
      %v1313 = vpack.c.b16 %v1283, %v1282
      %v1314 = vpack.c.b16 %v1285, %v1284
      %v1315 = vpack.c.b16 %v1287, %v1286
      %v1316 = vpack.c.b16 %v1289, %v1288
      %v1317 = vpack.c.b16 %v1291, %v1290
      %v1318 = vpack.c.b16 %v1293, %v1292
      %v1319 = vpack.c.b16 %v1295, %v1294
      %v1320 = vpack.c.b16 %v1297, %v1296
      %v1321 = vpack.c.b16 %v1299, %v1298
      %v1322 = vpack.c.b16 %v1301, %v1300
      %v1323 = vpack.c.b16 %v1303, %v1302
      %v1324 = vpack.c.b16 %v1305, %v1304
      %v1325 = vpack.c.b16 %v1307, %v1306
      %v1326 = vpack.c.b16 %v1309, %v1308
      %v1327 = vpack.c.b16 %v1310, %v1310
      %v1329 = vsel %vm727, %v1311, 0
      %v1332 = vsel %vm727, %v1312, 0
      %v1335 = vsel %vm727, %v1313, 0
      %v1338 = vsel %vm727, %v1314, 0
      %v1341 = vsel %vm727, %v1315, 0
      %v1344 = vsel %vm727, %v1316, 0
      %v1347 = vsel %vm727, %v1317, 0
      %v1350 = vsel %vm727, %v1318, 0
      %v1353 = vsel %vm727, %v1319, 0
      %v1356 = vsel %vm727, %v1320, 0
      %v1359 = vsel %vm727, %v1321, 0
      %v1362 = vsel %vm727, %v1322, 0
      %v1365 = vsel %vm727, %v1323, 0
      %v1368 = vsel %vm727, %v1324, 0
      %v1371 = vsel %vm727, %v1325, 0
      %v1374 = vsel %vm727, %v1326, 0
      %v1377 = vsel %vm727, %v1327, 0
      %v1380 = vand.u32 %v1244, %v782
      %1382 = vmatpush.bf16.msra.mxu0 0
      %1383 = vmatpush.bf16.msra.mxu0 0
      %1384 = vmatpush.bf16.msra.mxu0 0
      %1385 = vmatpush.bf16.msra.mxu0 0
      %1386 = vmatpush.bf16.msra.mxu0 0
      %1387 = vmatpush.bf16.msra.mxu0 0
      %1388 = vmatpush.bf16.msra.mxu0 0
      %1389 = vmatpush.bf16.msra.mxu0 %v1380
      %1390 = vmatmul.bf16.gmra.mxu0 %v1329
      %v1391 = vpop.f32.mrf.mxu0
      %v1392 = vadd.f32 0.0, %v1391
      %v1393 = vpop.f32.mrf.mxu0
      %v1394 = vadd.f32 0.0, %v1393
      %1395 = vmatmul.bf16.gmra.mxu0 %v1332
      %v1396 = vpop.f32.mrf.mxu0
      %v1397 = vadd.f32 0.0, %v1396
      %v1398 = vpop.f32.mrf.mxu0
      %v1399 = vadd.f32 0.0, %v1398
      %1400 = vmatmul.bf16.gmra.mxu0 %v1335
      %v1401 = vpop.f32.mrf.mxu0
      %v1402 = vadd.f32 0.0, %v1401
      %v1403 = vpop.f32.mrf.mxu0
      %v1404 = vadd.f32 0.0, %v1403
      %1405 = vmatmul.bf16.gmra.mxu0 %v1338
      %v1406 = vpop.f32.mrf.mxu0
      %v1407 = vadd.f32 0.0, %v1406
      %v1408 = vpop.f32.mrf.mxu0
      %v1409 = vadd.f32 0.0, %v1408
      %1410 = vmatmul.bf16.gmra.mxu0 %v1341
      %v1411 = vpop.f32.mrf.mxu0
      %v1412 = vadd.f32 0.0, %v1411
      %v1413 = vpop.f32.mrf.mxu0
      %v1414 = vadd.f32 0.0, %v1413
      %1415 = vmatmul.bf16.gmra.mxu0 %v1344
      %v1416 = vpop.f32.mrf.mxu0
      %v1417 = vadd.f32 0.0, %v1416
      %v1418 = vpop.f32.mrf.mxu0
      %v1419 = vadd.f32 0.0, %v1418
      %1420 = vmatmul.bf16.gmra.mxu0 %v1347
      %v1421 = vpop.f32.mrf.mxu0
      %v1422 = vadd.f32 0.0, %v1421
      %v1423 = vpop.f32.mrf.mxu0
      %v1424 = vadd.f32 0.0, %v1423
      %1425 = vmatmul.bf16.gmra.mxu0 %v1350
      %v1426 = vpop.f32.mrf.mxu0
      %v1427 = vadd.f32 0.0, %v1426
      %v1428 = vpop.f32.mrf.mxu0
      %v1429 = vadd.f32 0.0, %v1428
      %1430 = vmatmul.bf16.gmra.mxu0 %v1353
      %v1431 = vpop.f32.mrf.mxu0
      %v1432 = vadd.f32 0.0, %v1431
      %v1433 = vpop.f32.mrf.mxu0
      %v1434 = vadd.f32 0.0, %v1433
      %1435 = vmatmul.bf16.gmra.mxu0 %v1356
      %v1436 = vpop.f32.mrf.mxu0
      %v1437 = vadd.f32 0.0, %v1436
      %v1438 = vpop.f32.mrf.mxu0
      %v1439 = vadd.f32 0.0, %v1438
      %1440 = vmatmul.bf16.gmra.mxu0 %v1359
      %v1441 = vpop.f32.mrf.mxu0
      %v1442 = vadd.f32 0.0, %v1441
      %v1443 = vpop.f32.mrf.mxu0
      %v1444 = vadd.f32 0.0, %v1443
      %1445 = vmatmul.bf16.gmra.mxu0 %v1362
      %v1446 = vpop.f32.mrf.mxu0
      %v1447 = vadd.f32 0.0, %v1446
      %v1448 = vpop.f32.mrf.mxu0
      %v1449 = vadd.f32 0.0, %v1448
      %1450 = vmatmul.bf16.gmra.mxu0 %v1365
      %v1451 = vpop.f32.mrf.mxu0
      %v1452 = vadd.f32 0.0, %v1451
      %v1453 = vpop.f32.mrf.mxu0
      %v1454 = vadd.f32 0.0, %v1453
      %1455 = vmatmul.bf16.gmra.mxu0 %v1368
      %v1456 = vpop.f32.mrf.mxu0
      %v1457 = vadd.f32 0.0, %v1456
      %v1458 = vpop.f32.mrf.mxu0
      %v1459 = vadd.f32 0.0, %v1458
      %1460 = vmatmul.bf16.gmra.mxu0 %v1371
      %v1461 = vpop.f32.mrf.mxu0
      %v1462 = vadd.f32 0.0, %v1461
      %v1463 = vpop.f32.mrf.mxu0
      %v1464 = vadd.f32 0.0, %v1463
      %1465 = vmatmul.bf16.gmra.mxu0 %v1374
      %v1466 = vpop.f32.mrf.mxu0
      %v1467 = vadd.f32 0.0, %v1466
      %v1468 = vpop.f32.mrf.mxu0
      %v1469 = vadd.f32 0.0, %v1468
      %1470 = vmatmul.bf16.gmra.mxu0 %v1377
      %v1471 = vpop.f32.mrf.mxu0
      %v1472 = vadd.f32 0.0, %v1471
      %v1473 = vpop.f32.mrf.mxu0
      %1474 = vdwg.mxu0
      %v1475 = vadd.f32 %v1177, %v1392
      %v1476 = vadd.f32 %v1178, %v1394
      %v1477 = vadd.f32 %v1179, %v1397
      %v1478 = vadd.f32 %v1180, %v1399
      %v1479 = vadd.f32 %v1181, %v1402
      %v1480 = vadd.f32 %v1182, %v1404
      %v1481 = vadd.f32 %v1183, %v1407
      %v1482 = vadd.f32 %v1184, %v1409
      %v1483 = vadd.f32 %v1185, %v1412
      %v1484 = vadd.f32 %v1186, %v1414
      %v1485 = vadd.f32 %v1187, %v1417
      %v1486 = vadd.f32 %v1188, %v1419
      %v1487 = vadd.f32 %v1189, %v1422
      %v1488 = vadd.f32 %v1190, %v1424
      %v1489 = vadd.f32 %v1191, %v1427
      %v1490 = vadd.f32 %v1192, %v1429
      %v1491 = vadd.f32 %v1193, %v1432
      %v1492 = vadd.f32 %v1194, %v1434
      %v1493 = vadd.f32 %v1195, %v1437
      %v1494 = vadd.f32 %v1196, %v1439
      %v1495 = vadd.f32 %v1197, %v1442
      %v1496 = vadd.f32 %v1198, %v1444
      %v1497 = vadd.f32 %v1199, %v1447
      %v1498 = vadd.f32 %v1200, %v1449
      %v1499 = vadd.f32 %v1201, %v1452
      %v1500 = vadd.f32 %v1202, %v1454
      %v1501 = vadd.f32 %v1203, %v1457
      %v1502 = vadd.f32 %v1204, %v1459
      %v1503 = vadd.f32 %v1205, %v1462
      %v1504 = vadd.f32 %v1206, %v1464
      %v1505 = vadd.f32 %v1207, %v1467
      %v1506 = vadd.f32 %v1208, %v1469
      %v1507 = vadd.f32 %v1209, %v1472
      %v1508 = vlaneseq
      %v1509 = vshrl.u32 %v1508, 7
      %v1510 = vadd.s32 %v1509, 8
      %v1511 = vadd.s32 %v1509, 16
      %v1512 = vadd.s32 %v1509, 24
      %v1513 = vadd.s32 %v1509, 32
      %v1514 = vadd.s32 %v1509, 40
      %v1515 = vadd.s32 %v1509, 48
      %v1516 = vadd.s32 %v1509, 56
      %v1517 = vadd.s32 %v1509, 64
      %v1518 = vadd.s32 %v1509, 72
      %v1519 = vadd.s32 %v1509, 80
      %v1520 = vadd.s32 %v1509, 88
      %v1521 = vadd.s32 %v1509, 96
      %v1522 = vadd.s32 %v1509, 104
      %v1523 = vadd.s32 %v1509, 112
      %v1524 = vadd.s32 %v1509, 120
      %v1525 = vadd.s32 %v1509, 128
      %v1526 = vadd.s32 %v1509, 136
      %v1527 = vadd.s32 %v1509, 144
      %v1528 = vadd.s32 %v1509, 152
      %v1529 = vadd.s32 %v1509, 160
      %v1530 = vadd.s32 %v1509, 168
      %v1531 = vadd.s32 %v1509, 176
      %v1532 = vadd.s32 %v1509, 184
      %v1533 = vadd.s32 %v1509, 192
      %v1534 = vadd.s32 %v1509, 200
      %v1535 = vadd.s32 %v1509, 208
      %v1536 = vadd.s32 %v1509, 216
      %v1537 = vadd.s32 %v1509, 224
      %v1538 = vadd.s32 %v1509, 232
      %v1539 = vadd.s32 %v1509, 240
      %v1540 = vadd.s32 %v1509, 248
      %vm1541 = vcmp.lt.s32.totalorder %v1509, 0
      %v1542 = vsub.s32 0, %v1509
      %v1543 = vsel %vm1541, %v1542, %v1509
      %v1544 = vshrl.u32 %v1543, 4
      %v1545 = vand.u32 %v1543, 15
      %v1546 = vsub.s32 0, %v1545
      %v1547 = vsel %vm1541, %v1546, %v1545
      %vm1548 = vcmp.lt.s32.totalorder %v1510, 0
      %v1549 = vsub.s32 0, %v1510
      %v1550 = vsel %vm1548, %v1549, %v1510
      %v1551 = vshrl.u32 %v1550, 4
      %v1552 = vand.u32 %v1550, 15
      %v1553 = vsub.s32 0, %v1552
      %v1554 = vsel %vm1548, %v1553, %v1552
      %vm1555 = vcmp.lt.s32.totalorder %v1511, 0
      %v1556 = vsub.s32 0, %v1511
      %v1557 = vsel %vm1555, %v1556, %v1511
      %v1558 = vshrl.u32 %v1557, 4
      %v1559 = vand.u32 %v1557, 15
      %v1560 = vsub.s32 0, %v1559
      %v1561 = vsel %vm1555, %v1560, %v1559
      %vm1562 = vcmp.lt.s32.totalorder %v1512, 0
      %v1563 = vsub.s32 0, %v1512
      %v1564 = vsel %vm1562, %v1563, %v1512
      %v1565 = vshrl.u32 %v1564, 4
      %v1566 = vand.u32 %v1564, 15
      %v1567 = vsub.s32 0, %v1566
      %v1568 = vsel %vm1562, %v1567, %v1566
      %vm1569 = vcmp.lt.s32.totalorder %v1513, 0
      %v1570 = vsub.s32 0, %v1513
      %v1571 = vsel %vm1569, %v1570, %v1513
      %v1572 = vshrl.u32 %v1571, 4
      %v1573 = vand.u32 %v1571, 15
      %v1574 = vsub.s32 0, %v1573
      %v1575 = vsel %vm1569, %v1574, %v1573
      %vm1576 = vcmp.lt.s32.totalorder %v1514, 0
      %v1577 = vsub.s32 0, %v1514
      %v1578 = vsel %vm1576, %v1577, %v1514
      %v1579 = vshrl.u32 %v1578, 4
      %v1580 = vand.u32 %v1578, 15
      %v1581 = vsub.s32 0, %v1580
      %v1582 = vsel %vm1576, %v1581, %v1580
      %vm1583 = vcmp.lt.s32.totalorder %v1515, 0
      %v1584 = vsub.s32 0, %v1515
      %v1585 = vsel %vm1583, %v1584, %v1515
      %v1586 = vshrl.u32 %v1585, 4
      %v1587 = vand.u32 %v1585, 15
      %v1588 = vsub.s32 0, %v1587
      %v1589 = vsel %vm1583, %v1588, %v1587
      %vm1590 = vcmp.lt.s32.totalorder %v1516, 0
      %v1591 = vsub.s32 0, %v1516
      %v1592 = vsel %vm1590, %v1591, %v1516
      %v1593 = vshrl.u32 %v1592, 4
      %v1594 = vand.u32 %v1592, 15
      %v1595 = vsub.s32 0, %v1594
      %v1596 = vsel %vm1590, %v1595, %v1594
      %vm1597 = vcmp.lt.s32.totalorder %v1517, 0
      %v1598 = vsub.s32 0, %v1517
      %v1599 = vsel %vm1597, %v1598, %v1517
      %v1600 = vshrl.u32 %v1599, 4
      %v1601 = vand.u32 %v1599, 15
      %v1602 = vsub.s32 0, %v1601
      %v1603 = vsel %vm1597, %v1602, %v1601
      %vm1604 = vcmp.lt.s32.totalorder %v1518, 0
      %v1605 = vsub.s32 0, %v1518
      %v1606 = vsel %vm1604, %v1605, %v1518
      %v1607 = vshrl.u32 %v1606, 4
      %v1608 = vand.u32 %v1606, 15
      %v1609 = vsub.s32 0, %v1608
      %v1610 = vsel %vm1604, %v1609, %v1608
      %vm1611 = vcmp.lt.s32.totalorder %v1519, 0
      %v1612 = vsub.s32 0, %v1519
      %v1613 = vsel %vm1611, %v1612, %v1519
      %v1614 = vshrl.u32 %v1613, 4
      %v1615 = vand.u32 %v1613, 15
      %v1616 = vsub.s32 0, %v1615
      %v1617 = vsel %vm1611, %v1616, %v1615
      %vm1618 = vcmp.lt.s32.totalorder %v1520, 0
      %v1619 = vsub.s32 0, %v1520
      %v1620 = vsel %vm1618, %v1619, %v1520
      %v1621 = vshrl.u32 %v1620, 4
      %v1622 = vand.u32 %v1620, 15
      %v1623 = vsub.s32 0, %v1622
      %v1624 = vsel %vm1618, %v1623, %v1622
      %vm1625 = vcmp.lt.s32.totalorder %v1521, 0
      %v1626 = vsub.s32 0, %v1521
      %v1627 = vsel %vm1625, %v1626, %v1521
      %v1628 = vshrl.u32 %v1627, 4
      %v1629 = vand.u32 %v1627, 15
      %v1630 = vsub.s32 0, %v1629
      %v1631 = vsel %vm1625, %v1630, %v1629
      %vm1632 = vcmp.lt.s32.totalorder %v1522, 0
      %v1633 = vsub.s32 0, %v1522
      %v1634 = vsel %vm1632, %v1633, %v1522
      %v1635 = vshrl.u32 %v1634, 4
      %v1636 = vand.u32 %v1634, 15
      %v1637 = vsub.s32 0, %v1636
      %v1638 = vsel %vm1632, %v1637, %v1636
      %vm1639 = vcmp.lt.s32.totalorder %v1523, 0
      %v1640 = vsub.s32 0, %v1523
      %v1641 = vsel %vm1639, %v1640, %v1523
      %v1642 = vshrl.u32 %v1641, 4
      %v1643 = vand.u32 %v1641, 15
      %v1644 = vsub.s32 0, %v1643
      %v1645 = vsel %vm1639, %v1644, %v1643
      %vm1646 = vcmp.lt.s32.totalorder %v1524, 0
      %v1647 = vsub.s32 0, %v1524
      %v1648 = vsel %vm1646, %v1647, %v1524
      %v1649 = vshrl.u32 %v1648, 4
      %v1650 = vand.u32 %v1648, 15
      %v1651 = vsub.s32 0, %v1650
      %v1652 = vsel %vm1646, %v1651, %v1650
      %vm1653 = vcmp.lt.s32.totalorder %v1525, 0
      %v1654 = vsub.s32 0, %v1525
      %v1655 = vsel %vm1653, %v1654, %v1525
      %v1656 = vshrl.u32 %v1655, 4
      %v1657 = vand.u32 %v1655, 15
      %v1658 = vsub.s32 0, %v1657
      %v1659 = vsel %vm1653, %v1658, %v1657
      %vm1660 = vcmp.lt.s32.totalorder %v1526, 0
      %v1661 = vsub.s32 0, %v1526
      %v1662 = vsel %vm1660, %v1661, %v1526
      %v1663 = vshrl.u32 %v1662, 4
      %v1664 = vand.u32 %v1662, 15
      %v1665 = vsub.s32 0, %v1664
      %v1666 = vsel %vm1660, %v1665, %v1664
      %vm1667 = vcmp.lt.s32.totalorder %v1527, 0
      %v1668 = vsub.s32 0, %v1527
      %v1669 = vsel %vm1667, %v1668, %v1527
      %v1670 = vshrl.u32 %v1669, 4
      %v1671 = vand.u32 %v1669, 15
      %v1672 = vsub.s32 0, %v1671
      %v1673 = vsel %vm1667, %v1672, %v1671
      %vm1674 = vcmp.lt.s32.totalorder %v1528, 0
      %v1675 = vsub.s32 0, %v1528
      %v1676 = vsel %vm1674, %v1675, %v1528
      %v1677 = vshrl.u32 %v1676, 4
      %v1678 = vand.u32 %v1676, 15
      %v1679 = vsub.s32 0, %v1678
      %v1680 = vsel %vm1674, %v1679, %v1678
      %vm1681 = vcmp.lt.s32.totalorder %v1529, 0
      %v1682 = vsub.s32 0, %v1529
      %v1683 = vsel %vm1681, %v1682, %v1529
      %v1684 = vshrl.u32 %v1683, 4
      %v1685 = vand.u32 %v1683, 15
      %v1686 = vsub.s32 0, %v1685
      %v1687 = vsel %vm1681, %v1686, %v1685
      %vm1688 = vcmp.lt.s32.totalorder %v1530, 0
      %v1689 = vsub.s32 0, %v1530
      %v1690 = vsel %vm1688, %v1689, %v1530
      %v1691 = vshrl.u32 %v1690, 4
      %v1692 = vand.u32 %v1690, 15
      %v1693 = vsub.s32 0, %v1692
      %v1694 = vsel %vm1688, %v1693, %v1692
      %vm1695 = vcmp.lt.s32.totalorder %v1531, 0
      %v1696 = vsub.s32 0, %v1531
      %v1697 = vsel %vm1695, %v1696, %v1531
      %v1698 = vshrl.u32 %v1697, 4
      %v1699 = vand.u32 %v1697, 15
      %v1700 = vsub.s32 0, %v1699
      %v1701 = vsel %vm1695, %v1700, %v1699
      %vm1702 = vcmp.lt.s32.totalorder %v1532, 0
      %v1703 = vsub.s32 0, %v1532
      %v1704 = vsel %vm1702, %v1703, %v1532
      %v1705 = vshrl.u32 %v1704, 4
      %v1706 = vand.u32 %v1704, 15
      %v1707 = vsub.s32 0, %v1706
      %v1708 = vsel %vm1702, %v1707, %v1706
      %vm1709 = vcmp.lt.s32.totalorder %v1533, 0
      %v1710 = vsub.s32 0, %v1533
      %v1711 = vsel %vm1709, %v1710, %v1533
      %v1712 = vshrl.u32 %v1711, 4
      %v1713 = vand.u32 %v1711, 15
      %v1714 = vsub.s32 0, %v1713
      %v1715 = vsel %vm1709, %v1714, %v1713
      %vm1716 = vcmp.lt.s32.totalorder %v1534, 0
      %v1717 = vsub.s32 0, %v1534
      %v1718 = vsel %vm1716, %v1717, %v1534
      %v1719 = vshrl.u32 %v1718, 4
      %v1720 = vand.u32 %v1718, 15
      %v1721 = vsub.s32 0, %v1720
      %v1722 = vsel %vm1716, %v1721, %v1720
      %vm1723 = vcmp.lt.s32.totalorder %v1535, 0
      %v1724 = vsub.s32 0, %v1535
      %v1725 = vsel %vm1723, %v1724, %v1535
      %v1726 = vshrl.u32 %v1725, 4
      %v1727 = vand.u32 %v1725, 15
      %v1728 = vsub.s32 0, %v1727
      %v1729 = vsel %vm1723, %v1728, %v1727
      %vm1730 = vcmp.lt.s32.totalorder %v1536, 0
      %v1731 = vsub.s32 0, %v1536
      %v1732 = vsel %vm1730, %v1731, %v1536
      %v1733 = vshrl.u32 %v1732, 4
      %v1734 = vand.u32 %v1732, 15
      %v1735 = vsub.s32 0, %v1734
      %v1736 = vsel %vm1730, %v1735, %v1734
      %vm1737 = vcmp.lt.s32.totalorder %v1537, 0
      %v1738 = vsub.s32 0, %v1537
      %v1739 = vsel %vm1737, %v1738, %v1537
      %v1740 = vshrl.u32 %v1739, 4
      %v1741 = vand.u32 %v1739, 15
      %v1742 = vsub.s32 0, %v1741
      %v1743 = vsel %vm1737, %v1742, %v1741
      %vm1744 = vcmp.lt.s32.totalorder %v1538, 0
      %v1745 = vsub.s32 0, %v1538
      %v1746 = vsel %vm1744, %v1745, %v1538
      %v1747 = vshrl.u32 %v1746, 4
      %v1748 = vand.u32 %v1746, 15
      %v1749 = vsub.s32 0, %v1748
      %v1750 = vsel %vm1744, %v1749, %v1748
      %vm1751 = vcmp.lt.s32.totalorder %v1539, 0
      %v1752 = vsub.s32 0, %v1539
      %v1753 = vsel %vm1751, %v1752, %v1539
      %v1754 = vshrl.u32 %v1753, 4
      %v1755 = vand.u32 %v1753, 15
      %v1756 = vsub.s32 0, %v1755
      %v1757 = vsel %vm1751, %v1756, %v1755
      %vm1758 = vcmp.lt.s32.totalorder %v1540, 0
      %v1759 = vsub.s32 0, %v1540
      %v1760 = vsel %vm1758, %v1759, %v1540
      %v1761 = vshrl.u32 %v1760, 4
      %v1762 = vand.u32 %v1760, 15
      %v1763 = vsub.s32 0, %v1762
      %v1764 = vsel %vm1758, %v1763, %v1762
      %vm1765 = vcmp.ne.s32.totalorder %v1547, 0
      %vm1766 = vcmp.ne.s32.totalorder %v1554, 0
      %vm1767 = vcmp.ne.s32.totalorder %v1561, 0
      %vm1768 = vcmp.ne.s32.totalorder %v1568, 0
      %vm1769 = vcmp.ne.s32.totalorder %v1575, 0
      %vm1770 = vcmp.ne.s32.totalorder %v1582, 0
      %vm1771 = vcmp.ne.s32.totalorder %v1589, 0
      %vm1772 = vcmp.ne.s32.totalorder %v1596, 0
      %vm1773 = vcmp.ne.s32.totalorder %v1603, 0
      %vm1774 = vcmp.ne.s32.totalorder %v1610, 0
      %vm1775 = vcmp.ne.s32.totalorder %v1617, 0
      %vm1776 = vcmp.ne.s32.totalorder %v1624, 0
      %vm1777 = vcmp.ne.s32.totalorder %v1631, 0
      %vm1778 = vcmp.ne.s32.totalorder %v1638, 0
      %vm1779 = vcmp.ne.s32.totalorder %v1645, 0
      %vm1780 = vcmp.ne.s32.totalorder %v1652, 0
      %vm1781 = vcmp.ne.s32.totalorder %v1659, 0
      %vm1782 = vcmp.ne.s32.totalorder %v1666, 0
      %vm1783 = vcmp.ne.s32.totalorder %v1673, 0
      %vm1784 = vcmp.ne.s32.totalorder %v1680, 0
      %vm1785 = vcmp.ne.s32.totalorder %v1687, 0
      %vm1786 = vcmp.ne.s32.totalorder %v1694, 0
      %vm1787 = vcmp.ne.s32.totalorder %v1701, 0
      %vm1788 = vcmp.ne.s32.totalorder %v1708, 0
      %vm1789 = vcmp.ne.s32.totalorder %v1715, 0
      %vm1790 = vcmp.ne.s32.totalorder %v1722, 0
      %vm1791 = vcmp.ne.s32.totalorder %v1729, 0
      %vm1792 = vcmp.ne.s32.totalorder %v1736, 0
      %vm1793 = vcmp.ne.s32.totalorder %v1743, 0
      %vm1794 = vcmp.ne.s32.totalorder %v1750, 0
      %vm1795 = vcmp.ne.s32.totalorder %v1757, 0
      %vm1796 = vcmp.ne.s32.totalorder %v1764, 0
      %vm1797 = vcmp.lt.s32.totalorder %v1547, 0
      %vm1798 = vcmp.lt.s32.totalorder %v1554, 0
      %vm1799 = vcmp.lt.s32.totalorder %v1561, 0
      %vm1800 = vcmp.lt.s32.totalorder %v1568, 0
      %vm1801 = vcmp.lt.s32.totalorder %v1575, 0
      %vm1802 = vcmp.lt.s32.totalorder %v1582, 0
      %vm1803 = vcmp.lt.s32.totalorder %v1589, 0
      %vm1804 = vcmp.lt.s32.totalorder %v1596, 0
      %vm1805 = vcmp.lt.s32.totalorder %v1603, 0
      %vm1806 = vcmp.lt.s32.totalorder %v1610, 0
      %vm1807 = vcmp.lt.s32.totalorder %v1617, 0
      %vm1808 = vcmp.lt.s32.totalorder %v1624, 0
      %vm1809 = vcmp.lt.s32.totalorder %v1631, 0
      %vm1810 = vcmp.lt.s32.totalorder %v1638, 0
      %vm1811 = vcmp.lt.s32.totalorder %v1645, 0
      %vm1812 = vcmp.lt.s32.totalorder %v1652, 0
      %vm1813 = vcmp.lt.s32.totalorder %v1659, 0
      %vm1814 = vcmp.lt.s32.totalorder %v1666, 0
      %vm1815 = vcmp.lt.s32.totalorder %v1673, 0
      %vm1816 = vcmp.lt.s32.totalorder %v1680, 0
      %vm1817 = vcmp.lt.s32.totalorder %v1687, 0
      %vm1818 = vcmp.lt.s32.totalorder %v1694, 0
      %vm1819 = vcmp.lt.s32.totalorder %v1701, 0
      %vm1820 = vcmp.lt.s32.totalorder %v1708, 0
      %vm1821 = vcmp.lt.s32.totalorder %v1715, 0
      %vm1822 = vcmp.lt.s32.totalorder %v1722, 0
      %vm1823 = vcmp.lt.s32.totalorder %v1729, 0
      %vm1824 = vcmp.lt.s32.totalorder %v1736, 0
      %vm1825 = vcmp.lt.s32.totalorder %v1743, 0
      %vm1826 = vcmp.lt.s32.totalorder %v1750, 0
      %vm1827 = vcmp.lt.s32.totalorder %v1757, 0
      %vm1828 = vcmp.lt.s32.totalorder %v1764, 0
      %vm1829 = vmand %vm1797, %vm1765
      %vm1830 = vmand %vm1798, %vm1766
      %vm1831 = vmand %vm1799, %vm1767
      %vm1832 = vmand %vm1800, %vm1768
      %vm1833 = vmand %vm1801, %vm1769
      %vm1834 = vmand %vm1802, %vm1770
      %vm1835 = vmand %vm1803, %vm1771
      %vm1836 = vmand %vm1804, %vm1772
      %vm1837 = vmand %vm1805, %vm1773
      %vm1838 = vmand %vm1806, %vm1774
      %vm1839 = vmand %vm1807, %vm1775
      %vm1840 = vmand %vm1808, %vm1776
      %vm1841 = vmand %vm1809, %vm1777
      %vm1842 = vmand %vm1810, %vm1778
      %vm1843 = vmand %vm1811, %vm1779
      %vm1844 = vmand %vm1812, %vm1780
      %vm1845 = vmand %vm1813, %vm1781
      %vm1846 = vmand %vm1814, %vm1782
      %vm1847 = vmand %vm1815, %vm1783
      %vm1848 = vmand %vm1816, %vm1784
      %vm1849 = vmand %vm1817, %vm1785
      %vm1850 = vmand %vm1818, %vm1786
      %vm1851 = vmand %vm1819, %vm1787
      %vm1852 = vmand %vm1820, %vm1788
      %vm1853 = vmand %vm1821, %vm1789
      %vm1854 = vmand %vm1822, %vm1790
      %vm1855 = vmand %vm1823, %vm1791
      %vm1856 = vmand %vm1824, %vm1792
      %vm1857 = vmand %vm1825, %vm1793
      %vm1858 = vmand %vm1826, %vm1794
      %vm1859 = vmand %vm1827, %vm1795
      %vm1860 = vmand %vm1828, %vm1796
      %v1861 = vadd.s32 %v1547, 16
      %v1862 = vadd.s32 %v1554, 16
      %v1863 = vadd.s32 %v1561, 16
      %v1864 = vadd.s32 %v1568, 16
      %v1865 = vadd.s32 %v1575, 16
      %v1866 = vadd.s32 %v1582, 16
      %v1867 = vadd.s32 %v1589, 16
      %v1868 = vadd.s32 %v1596, 16
      %v1869 = vadd.s32 %v1603, 16
      %v1870 = vadd.s32 %v1610, 16
      %v1871 = vadd.s32 %v1617, 16
      %v1872 = vadd.s32 %v1624, 16
      %v1873 = vadd.s32 %v1631, 16
      %v1874 = vadd.s32 %v1638, 16
      %v1875 = vadd.s32 %v1645, 16
      %v1876 = vadd.s32 %v1652, 16
      %v1877 = vadd.s32 %v1659, 16
      %v1878 = vadd.s32 %v1666, 16
      %v1879 = vadd.s32 %v1673, 16
      %v1880 = vadd.s32 %v1680, 16
      %v1881 = vadd.s32 %v1687, 16
      %v1882 = vadd.s32 %v1694, 16
      %v1883 = vadd.s32 %v1701, 16
      %v1884 = vadd.s32 %v1708, 16
      %v1885 = vadd.s32 %v1715, 16
      %v1886 = vadd.s32 %v1722, 16
      %v1887 = vadd.s32 %v1729, 16
      %v1888 = vadd.s32 %v1736, 16
      %v1889 = vadd.s32 %v1743, 16
      %v1890 = vadd.s32 %v1750, 16
      %v1891 = vadd.s32 %v1757, 16
      %v1892 = vadd.s32 %v1764, 16
      %v1893 = vsel %vm1829, %v1861, %v1547
      %v1894 = vsel %vm1830, %v1862, %v1554
      %v1895 = vsel %vm1831, %v1863, %v1561
      %v1896 = vsel %vm1832, %v1864, %v1568
      %v1897 = vsel %vm1833, %v1865, %v1575
      %v1898 = vsel %vm1834, %v1866, %v1582
      %v1899 = vsel %vm1835, %v1867, %v1589
      %v1900 = vsel %vm1836, %v1868, %v1596
      %v1901 = vsel %vm1837, %v1869, %v1603
      %v1902 = vsel %vm1838, %v1870, %v1610
      %v1903 = vsel %vm1839, %v1871, %v1617
      %v1904 = vsel %vm1840, %v1872, %v1624
      %v1905 = vsel %vm1841, %v1873, %v1631
      %v1906 = vsel %vm1842, %v1874, %v1638
      %v1907 = vsel %vm1843, %v1875, %v1645
      %v1908 = vsel %vm1844, %v1876, %v1652
      %v1909 = vsel %vm1845, %v1877, %v1659
      %v1910 = vsel %vm1846, %v1878, %v1666
      %v1911 = vsel %vm1847, %v1879, %v1673
      %v1912 = vsel %vm1848, %v1880, %v1680
      %v1913 = vsel %vm1849, %v1881, %v1687
      %v1914 = vsel %vm1850, %v1882, %v1694
      %v1915 = vsel %vm1851, %v1883, %v1701
      %v1916 = vsel %vm1852, %v1884, %v1708
      %v1917 = vsel %vm1853, %v1885, %v1715
      %v1918 = vsel %vm1854, %v1886, %v1722
      %v1919 = vsel %vm1855, %v1887, %v1729
      %v1920 = vsel %vm1856, %v1888, %v1736
      %v1921 = vsel %vm1857, %v1889, %v1743
      %v1922 = vsel %vm1858, %v1890, %v1750
      %v1923 = vsel %vm1859, %v1891, %v1757
      %v1924 = vsel %vm1860, %v1892, %v1764
      %vm1925 = vcmp.gt.s32.totalorder %v1893, 0
      %vm1926 = vcmp.gt.s32.totalorder %v1894, 0
      %vm1927 = vcmp.gt.s32.totalorder %v1895, 0
      %vm1928 = vcmp.gt.s32.totalorder %v1896, 0
      %vm1929 = vcmp.gt.s32.totalorder %v1897, 0
      %vm1930 = vcmp.gt.s32.totalorder %v1898, 0
      %vm1931 = vcmp.gt.s32.totalorder %v1899, 0
      %vm1932 = vcmp.gt.s32.totalorder %v1900, 0
      %vm1933 = vcmp.gt.s32.totalorder %v1901, 0
      %vm1934 = vcmp.gt.s32.totalorder %v1902, 0
      %vm1935 = vcmp.gt.s32.totalorder %v1903, 0
      %vm1936 = vcmp.gt.s32.totalorder %v1904, 0
      %vm1937 = vcmp.gt.s32.totalorder %v1905, 0
      %vm1938 = vcmp.gt.s32.totalorder %v1906, 0
      %vm1939 = vcmp.gt.s32.totalorder %v1907, 0
      %vm1940 = vcmp.gt.s32.totalorder %v1908, 0
      %vm1941 = vcmp.gt.s32.totalorder %v1909, 0
      %vm1942 = vcmp.gt.s32.totalorder %v1910, 0
      %vm1943 = vcmp.gt.s32.totalorder %v1911, 0
      %vm1944 = vcmp.gt.s32.totalorder %v1912, 0
      %vm1945 = vcmp.gt.s32.totalorder %v1913, 0
      %vm1946 = vcmp.gt.s32.totalorder %v1914, 0
      %vm1947 = vcmp.gt.s32.totalorder %v1915, 0
      %vm1948 = vcmp.gt.s32.totalorder %v1916, 0
      %vm1949 = vcmp.gt.s32.totalorder %v1917, 0
      %vm1950 = vcmp.gt.s32.totalorder %v1918, 0
      %vm1951 = vcmp.gt.s32.totalorder %v1919, 0
      %vm1952 = vcmp.gt.s32.totalorder %v1920, 0
      %vm1953 = vcmp.gt.s32.totalorder %v1921, 0
      %vm1954 = vcmp.gt.s32.totalorder %v1922, 0
      %vm1955 = vcmp.gt.s32.totalorder %v1923, 0
      %vm1956 = vcmp.gt.s32.totalorder %v1924, 0
      %v1957 = vsel %vm1925, 1, 0
      %v1958 = vsel %vm1926, 1, 0
      %v1959 = vsel %vm1927, 1, 0
      %v1960 = vsel %vm1928, 1, 0
      %v1961 = vsel %vm1929, 1, 0
      %v1962 = vsel %vm1930, 1, 0
      %v1963 = vsel %vm1931, 1, 0
      %v1964 = vsel %vm1932, 1, 0
      %v1965 = vsel %vm1933, 1, 0
      %v1966 = vsel %vm1934, 1, 0
      %v1967 = vsel %vm1935, 1, 0
      %v1968 = vsel %vm1936, 1, 0
      %v1969 = vsel %vm1937, 1, 0
      %v1970 = vsel %vm1938, 1, 0
      %v1971 = vsel %vm1939, 1, 0
      %v1972 = vsel %vm1940, 1, 0
      %v1973 = vsel %vm1941, 1, 0
      %v1974 = vsel %vm1942, 1, 0
      %v1975 = vsel %vm1943, 1, 0
      %v1976 = vsel %vm1944, 1, 0
      %v1977 = vsel %vm1945, 1, 0
      %v1978 = vsel %vm1946, 1, 0
      %v1979 = vsel %vm1947, 1, 0
      %v1980 = vsel %vm1948, 1, 0
      %v1981 = vsel %vm1949, 1, 0
      %v1982 = vsel %vm1950, 1, 0
      %v1983 = vsel %vm1951, 1, 0
      %v1984 = vsel %vm1952, 1, 0
      %v1985 = vsel %vm1953, 1, 0
      %v1986 = vsel %vm1954, 1, 0
      %v1987 = vsel %vm1955, 1, 0
      %v1988 = vsel %vm1956, 1, 0
      %v1989 = vcvt.s32.f32 %v1957
      %v1990 = vcvt.s32.f32 %v1958
      %v1991 = vcvt.s32.f32 %v1959
      %v1992 = vcvt.s32.f32 %v1960
      %v1993 = vcvt.s32.f32 %v1961
      %v1994 = vcvt.s32.f32 %v1962
      %v1995 = vcvt.s32.f32 %v1963
      %v1996 = vcvt.s32.f32 %v1964
      %v1997 = vcvt.s32.f32 %v1965
      %v1998 = vcvt.s32.f32 %v1966
      %v1999 = vcvt.s32.f32 %v1967
      %v2000 = vcvt.s32.f32 %v1968
      %v2001 = vcvt.s32.f32 %v1969
      %v2002 = vcvt.s32.f32 %v1970
      %v2003 = vcvt.s32.f32 %v1971
      %v2004 = vcvt.s32.f32 %v1972
      %v2005 = vcvt.s32.f32 %v1973
      %v2006 = vcvt.s32.f32 %v1974
      %v2007 = vcvt.s32.f32 %v1975
      %v2008 = vcvt.s32.f32 %v1976
      %v2009 = vcvt.s32.f32 %v1977
      %v2010 = vcvt.s32.f32 %v1978
      %v2011 = vcvt.s32.f32 %v1979
      %v2012 = vcvt.s32.f32 %v1980
      %v2013 = vcvt.s32.f32 %v1981
      %v2014 = vcvt.s32.f32 %v1982
      %v2015 = vcvt.s32.f32 %v1983
      %v2016 = vcvt.s32.f32 %v1984
      %v2017 = vcvt.s32.f32 %v1985
      %v2018 = vcvt.s32.f32 %v1986
      %v2019 = vcvt.s32.f32 %v1987
      %v2020 = vcvt.s32.f32 %v1988
      %vm2021 = vcmp.lt.s32.totalorder %v1893, 15
      %vm2022 = vcmp.lt.s32.totalorder %v1894, 15
      %vm2023 = vcmp.lt.s32.totalorder %v1895, 15
      %vm2024 = vcmp.lt.s32.totalorder %v1896, 15
      %vm2025 = vcmp.lt.s32.totalorder %v1897, 15
      %vm2026 = vcmp.lt.s32.totalorder %v1898, 15
      %vm2027 = vcmp.lt.s32.totalorder %v1899, 15
      %vm2028 = vcmp.lt.s32.totalorder %v1900, 15
      %vm2029 = vcmp.lt.s32.totalorder %v1901, 15
      %vm2030 = vcmp.lt.s32.totalorder %v1902, 15
      %vm2031 = vcmp.lt.s32.totalorder %v1903, 15
      %vm2032 = vcmp.lt.s32.totalorder %v1904, 15
      %vm2033 = vcmp.lt.s32.totalorder %v1905, 15
      %vm2034 = vcmp.lt.s32.totalorder %v1906, 15
      %vm2035 = vcmp.lt.s32.totalorder %v1907, 15
      %vm2036 = vcmp.lt.s32.totalorder %v1908, 15
      %vm2037 = vcmp.lt.s32.totalorder %v1909, 15
      %vm2038 = vcmp.lt.s32.totalorder %v1910, 15
      %vm2039 = vcmp.lt.s32.totalorder %v1911, 15
      %vm2040 = vcmp.lt.s32.totalorder %v1912, 15
      %vm2041 = vcmp.lt.s32.totalorder %v1913, 15
      %vm2042 = vcmp.lt.s32.totalorder %v1914, 15
      %vm2043 = vcmp.lt.s32.totalorder %v1915, 15
      %vm2044 = vcmp.lt.s32.totalorder %v1916, 15
      %vm2045 = vcmp.lt.s32.totalorder %v1917, 15
      %vm2046 = vcmp.lt.s32.totalorder %v1918, 15
      %vm2047 = vcmp.lt.s32.totalorder %v1919, 15
      %vm2048 = vcmp.lt.s32.totalorder %v1920, 15
      %vm2049 = vcmp.lt.s32.totalorder %v1921, 15
      %vm2050 = vcmp.lt.s32.totalorder %v1922, 15
      %vm2051 = vcmp.lt.s32.totalorder %v1923, 15
      %vm2052 = vcmp.lt.s32.totalorder %v1924, 15
      %v2053 = vsel %vm2021, 1, 0
      %v2054 = vsel %vm2022, 1, 0
      %v2055 = vsel %vm2023, 1, 0
      %v2056 = vsel %vm2024, 1, 0
      %v2057 = vsel %vm2025, 1, 0
      %v2058 = vsel %vm2026, 1, 0
      %v2059 = vsel %vm2027, 1, 0
      %v2060 = vsel %vm2028, 1, 0
      %v2061 = vsel %vm2029, 1, 0
      %v2062 = vsel %vm2030, 1, 0
      %v2063 = vsel %vm2031, 1, 0
      %v2064 = vsel %vm2032, 1, 0
      %v2065 = vsel %vm2033, 1, 0
      %v2066 = vsel %vm2034, 1, 0
      %v2067 = vsel %vm2035, 1, 0
      %v2068 = vsel %vm2036, 1, 0
      %v2069 = vsel %vm2037, 1, 0
      %v2070 = vsel %vm2038, 1, 0
      %v2071 = vsel %vm2039, 1, 0
      %v2072 = vsel %vm2040, 1, 0
      %v2073 = vsel %vm2041, 1, 0
      %v2074 = vsel %vm2042, 1, 0
      %v2075 = vsel %vm2043, 1, 0
      %v2076 = vsel %vm2044, 1, 0
      %v2077 = vsel %vm2045, 1, 0
      %v2078 = vsel %vm2046, 1, 0
      %v2079 = vsel %vm2047, 1, 0
      %v2080 = vsel %vm2048, 1, 0
      %v2081 = vsel %vm2049, 1, 0
      %v2082 = vsel %vm2050, 1, 0
      %v2083 = vsel %vm2051, 1, 0
      %v2084 = vsel %vm2052, 1, 0
      %v2085 = vcvt.s32.f32 %v2053
      %v2086 = vcvt.s32.f32 %v2054
      %v2087 = vcvt.s32.f32 %v2055
      %v2088 = vcvt.s32.f32 %v2056
      %v2089 = vcvt.s32.f32 %v2057
      %v2090 = vcvt.s32.f32 %v2058
      %v2091 = vcvt.s32.f32 %v2059
      %v2092 = vcvt.s32.f32 %v2060
      %v2093 = vcvt.s32.f32 %v2061
      %v2094 = vcvt.s32.f32 %v2062
      %v2095 = vcvt.s32.f32 %v2063
      %v2096 = vcvt.s32.f32 %v2064
      %v2097 = vcvt.s32.f32 %v2065
      %v2098 = vcvt.s32.f32 %v2066
      %v2099 = vcvt.s32.f32 %v2067
      %v2100 = vcvt.s32.f32 %v2068
      %v2101 = vcvt.s32.f32 %v2069
      %v2102 = vcvt.s32.f32 %v2070
      %v2103 = vcvt.s32.f32 %v2071
      %v2104 = vcvt.s32.f32 %v2072
      %v2105 = vcvt.s32.f32 %v2073
      %v2106 = vcvt.s32.f32 %v2074
      %v2107 = vcvt.s32.f32 %v2075
      %v2108 = vcvt.s32.f32 %v2076
      %v2109 = vcvt.s32.f32 %v2077
      %v2110 = vcvt.s32.f32 %v2078
      %v2111 = vcvt.s32.f32 %v2079
      %v2112 = vcvt.s32.f32 %v2080
      %v2113 = vcvt.s32.f32 %v2081
      %v2114 = vcvt.s32.f32 %v2082
      %v2115 = vcvt.s32.f32 %v2083
      %v2116 = vcvt.s32.f32 %v2084
      %v2117 = vmul.f32 %v1475, %v1989
      %v2118 = vmul.f32 %v1476, %v1990
      %v2119 = vmul.f32 %v1477, %v1991
      %v2120 = vmul.f32 %v1478, %v1992
      %v2121 = vmul.f32 %v1479, %v1993
      %v2122 = vmul.f32 %v1480, %v1994
      %v2123 = vmul.f32 %v1481, %v1995
      %v2124 = vmul.f32 %v1482, %v1996
      %v2125 = vmul.f32 %v1483, %v1997
      %v2126 = vmul.f32 %v1484, %v1998
      %v2127 = vmul.f32 %v1485, %v1999
      %v2128 = vmul.f32 %v1486, %v2000
      %v2129 = vmul.f32 %v1487, %v2001
      %v2130 = vmul.f32 %v1488, %v2002
      %v2131 = vmul.f32 %v1489, %v2003
      %v2132 = vmul.f32 %v1490, %v2004
      %v2133 = vmul.f32 %v1491, %v2005
      %v2134 = vmul.f32 %v1492, %v2006
      %v2135 = vmul.f32 %v1493, %v2007
      %v2136 = vmul.f32 %v1494, %v2008
      %v2137 = vmul.f32 %v1495, %v2009
      %v2138 = vmul.f32 %v1496, %v2010
      %v2139 = vmul.f32 %v1497, %v2011
      %v2140 = vmul.f32 %v1498, %v2012
      %v2141 = vmul.f32 %v1499, %v2013
      %v2142 = vmul.f32 %v1500, %v2014
      %v2143 = vmul.f32 %v1501, %v2015
      %v2144 = vmul.f32 %v1502, %v2016
      %v2145 = vmul.f32 %v1503, %v2017
      %v2146 = vmul.f32 %v1504, %v2018
      %v2147 = vmul.f32 %v1505, %v2019
      %v2148 = vmul.f32 %v1506, %v2020
      %v2181 = vrot.slane %v2117, 7
      %v2182 = vrot.slane %v2118, 7
      %v2183 = vsel %vm779, %v2181, %v2182
      %v2184 = vrot.slane %v2119, 7
      %v2185 = vsel %vm779, %v2182, %v2184
      %v2186 = vrot.slane %v2120, 7
      %v2187 = vsel %vm779, %v2184, %v2186
      %v2188 = vrot.slane %v2121, 7
      %v2189 = vsel %vm779, %v2186, %v2188
      %v2190 = vrot.slane %v2122, 7
      %v2191 = vsel %vm779, %v2188, %v2190
      %v2192 = vrot.slane %v2123, 7
      %v2193 = vsel %vm779, %v2190, %v2192
      %v2194 = vrot.slane %v2124, 7
      %v2195 = vsel %vm779, %v2192, %v2194
      %v2196 = vrot.slane %v2125, 7
      %v2197 = vsel %vm779, %v2194, %v2196
      %v2198 = vrot.slane %v2126, 7
      %v2199 = vsel %vm779, %v2196, %v2198
      %v2200 = vrot.slane %v2127, 7
      %v2201 = vsel %vm779, %v2198, %v2200
      %v2202 = vrot.slane %v2128, 7
      %v2203 = vsel %vm779, %v2200, %v2202
      %v2204 = vrot.slane %v2129, 7
      %v2205 = vsel %vm779, %v2202, %v2204
      %v2206 = vrot.slane %v2130, 7
      %v2207 = vsel %vm779, %v2204, %v2206
      %v2208 = vrot.slane %v2131, 7
      %v2209 = vsel %vm779, %v2206, %v2208
      %v2210 = vrot.slane %v2132, 7
      %v2211 = vsel %vm779, %v2208, %v2210
      %v2212 = vrot.slane %v2133, 7
      %v2213 = vsel %vm779, %v2210, %v2212
      %v2214 = vrot.slane %v2134, 7
      %v2215 = vsel %vm779, %v2212, %v2214
      %v2216 = vrot.slane %v2135, 7
      %v2217 = vsel %vm779, %v2214, %v2216
      %v2218 = vrot.slane %v2136, 7
      %v2219 = vsel %vm779, %v2216, %v2218
      %v2220 = vrot.slane %v2137, 7
      %v2221 = vsel %vm779, %v2218, %v2220
      %v2222 = vrot.slane %v2138, 7
      %v2223 = vsel %vm779, %v2220, %v2222
      %v2224 = vrot.slane %v2139, 7
      %v2225 = vsel %vm779, %v2222, %v2224
      %v2226 = vrot.slane %v2140, 7
      %v2227 = vsel %vm779, %v2224, %v2226
      %v2228 = vrot.slane %v2141, 7
      %v2229 = vsel %vm779, %v2226, %v2228
      %v2230 = vrot.slane %v2142, 7
      %v2231 = vsel %vm779, %v2228, %v2230
      %v2232 = vrot.slane %v2143, 7
      %v2233 = vsel %vm779, %v2230, %v2232
      %v2234 = vrot.slane %v2144, 7
      %v2235 = vsel %vm779, %v2232, %v2234
      %v2236 = vrot.slane %v2145, 7
      %v2237 = vsel %vm779, %v2234, %v2236
      %v2238 = vrot.slane %v2146, 7
      %v2239 = vsel %vm779, %v2236, %v2238
      %v2240 = vrot.slane %v2147, 7
      %v2241 = vsel %vm779, %v2238, %v2240
      %v2242 = vrot.slane %v2148, 7
      %v2243 = vsel %vm779, %v2240, %v2242
      %2244 = vrot.lane.b32.xlu0 %v2181, 16
      %v2245 = vpop.permute.xlu0 %2244
      %2246 = vrot.lane.b32.xlu0 %v2183, 16
      %v2247 = vpop.permute.xlu0 %2246
      %2248 = vrot.lane.b32.xlu0 %v2185, 16
      %v2249 = vpop.permute.xlu0 %2248
      %2250 = vrot.lane.b32.xlu0 %v2187, 16
      %v2251 = vpop.permute.xlu0 %2250
      %2252 = vrot.lane.b32.xlu0 %v2189, 16
      %v2253 = vpop.permute.xlu0 %2252
      %2254 = vrot.lane.b32.xlu0 %v2191, 16
      %v2255 = vpop.permute.xlu0 %2254
      %2256 = vrot.lane.b32.xlu0 %v2193, 16
      %v2257 = vpop.permute.xlu0 %2256
      %2258 = vrot.lane.b32.xlu0 %v2195, 16
      %v2259 = vpop.permute.xlu0 %2258
      %2260 = vrot.lane.b32.xlu0 %v2197, 16
      %v2261 = vpop.permute.xlu0 %2260
      %2262 = vrot.lane.b32.xlu0 %v2199, 16
      %v2263 = vpop.permute.xlu0 %2262
      %2264 = vrot.lane.b32.xlu0 %v2201, 16
      %v2265 = vpop.permute.xlu0 %2264
      %2266 = vrot.lane.b32.xlu0 %v2203, 16
      %v2267 = vpop.permute.xlu0 %2266
      %2268 = vrot.lane.b32.xlu0 %v2205, 16
      %v2269 = vpop.permute.xlu0 %2268
      %2270 = vrot.lane.b32.xlu0 %v2207, 16
      %v2271 = vpop.permute.xlu0 %2270
      %2272 = vrot.lane.b32.xlu0 %v2209, 16
      %v2273 = vpop.permute.xlu0 %2272
      %2274 = vrot.lane.b32.xlu0 %v2211, 16
      %v2275 = vpop.permute.xlu0 %2274
      %2276 = vrot.lane.b32.xlu0 %v2213, 16
      %v2277 = vpop.permute.xlu0 %2276
      %2278 = vrot.lane.b32.xlu0 %v2215, 16
      %v2279 = vpop.permute.xlu0 %2278
      %2280 = vrot.lane.b32.xlu0 %v2217, 16
      %v2281 = vpop.permute.xlu0 %2280
      %2282 = vrot.lane.b32.xlu0 %v2219, 16
      %v2283 = vpop.permute.xlu0 %2282
      %2284 = vrot.lane.b32.xlu0 %v2221, 16
      %v2285 = vpop.permute.xlu0 %2284
      %2286 = vrot.lane.b32.xlu0 %v2223, 16
      %v2287 = vpop.permute.xlu0 %2286
      %2288 = vrot.lane.b32.xlu0 %v2225, 16
      %v2289 = vpop.permute.xlu0 %2288
      %2290 = vrot.lane.b32.xlu0 %v2227, 16
      %v2291 = vpop.permute.xlu0 %2290
      %2292 = vrot.lane.b32.xlu0 %v2229, 16
      %v2293 = vpop.permute.xlu0 %2292
      %2294 = vrot.lane.b32.xlu0 %v2231, 16
      %v2295 = vpop.permute.xlu0 %2294
      %2296 = vrot.lane.b32.xlu0 %v2233, 16
      %v2297 = vpop.permute.xlu0 %2296
      %2298 = vrot.lane.b32.xlu0 %v2235, 16
      %v2299 = vpop.permute.xlu0 %2298
      %2300 = vrot.lane.b32.xlu0 %v2237, 16
      %v2301 = vpop.permute.xlu0 %2300
      %2302 = vrot.lane.b32.xlu0 %v2239, 16
      %v2303 = vpop.permute.xlu0 %2302
      %2304 = vrot.lane.b32.xlu0 %v2241, 16
      %v2305 = vpop.permute.xlu0 %2304
      %2306 = vrot.lane.b32.xlu0 %v2243, 16
      %v2307 = vpop.permute.xlu0 %2306
      %2308 = vrot.lane.b32.xlu0 %v2242, 16
      %v2309 = vpop.permute.xlu0 %2308
      %v2343 = vadd.f32 %v1475, %v2245
      %v2344 = vadd.f32 %v1476, %v2247
      %v2345 = vadd.f32 %v1477, %v2249
      %v2346 = vadd.f32 %v1478, %v2251
      %v2347 = vadd.f32 %v1479, %v2253
      %v2348 = vadd.f32 %v1480, %v2255
      %v2349 = vadd.f32 %v1481, %v2257
      %v2350 = vadd.f32 %v1482, %v2259
      %v2351 = vadd.f32 %v1483, %v2261
      %v2352 = vadd.f32 %v1484, %v2263
      %v2353 = vadd.f32 %v1485, %v2265
      %v2354 = vadd.f32 %v1486, %v2267
      %v2355 = vadd.f32 %v1487, %v2269
      %v2356 = vadd.f32 %v1488, %v2271
      %v2357 = vadd.f32 %v1489, %v2273
      %v2358 = vadd.f32 %v1490, %v2275
      %v2359 = vadd.f32 %v1491, %v2277
      %v2360 = vadd.f32 %v1492, %v2279
      %v2361 = vadd.f32 %v1493, %v2281
      %v2362 = vadd.f32 %v1494, %v2283
      %v2363 = vadd.f32 %v1495, %v2285
      %v2364 = vadd.f32 %v1496, %v2287
      %v2365 = vadd.f32 %v1497, %v2289
      %v2366 = vadd.f32 %v1498, %v2291
      %v2367 = vadd.f32 %v1499, %v2293
      %v2368 = vadd.f32 %v1500, %v2295
      %v2369 = vadd.f32 %v1501, %v2297
      %v2370 = vadd.f32 %v1502, %v2299
      %v2371 = vadd.f32 %v1503, %v2301
      %v2372 = vadd.f32 %v1504, %v2303
      %v2373 = vadd.f32 %v1505, %v2305
      %v2374 = vadd.f32 %v1506, %v2307
      %v2375 = vadd.f32 %v1507, %v2309
      %v2408 = vrot.slane %v2085, 6
      %v2409 = vrot.slane %v2086, 6
      %v2410 = vsel %vm780, %v2408, %v2409
      %v2411 = vrot.slane %v2087, 6
      %v2412 = vsel %vm780, %v2409, %v2411
      %v2413 = vrot.slane %v2088, 6
      %v2414 = vsel %vm780, %v2411, %v2413
      %v2415 = vrot.slane %v2089, 6
      %v2416 = vsel %vm780, %v2413, %v2415
      %v2417 = vrot.slane %v2090, 6
      %v2418 = vsel %vm780, %v2415, %v2417
      %v2419 = vrot.slane %v2091, 6
      %v2420 = vsel %vm780, %v2417, %v2419
      %v2421 = vrot.slane %v2092, 6
      %v2422 = vsel %vm780, %v2419, %v2421
      %v2423 = vrot.slane %v2093, 6
      %v2424 = vsel %vm780, %v2421, %v2423
      %v2425 = vrot.slane %v2094, 6
      %v2426 = vsel %vm780, %v2423, %v2425
      %v2427 = vrot.slane %v2095, 6
      %v2428 = vsel %vm780, %v2425, %v2427
      %v2429 = vrot.slane %v2096, 6
      %v2430 = vsel %vm780, %v2427, %v2429
      %v2431 = vrot.slane %v2097, 6
      %v2432 = vsel %vm780, %v2429, %v2431
      %v2433 = vrot.slane %v2098, 6
      %v2434 = vsel %vm780, %v2431, %v2433
      %v2435 = vrot.slane %v2099, 6
      %v2436 = vsel %vm780, %v2433, %v2435
      %v2437 = vrot.slane %v2100, 6
      %v2438 = vsel %vm780, %v2435, %v2437
      %v2439 = vrot.slane %v2101, 6
      %v2440 = vsel %vm780, %v2437, %v2439
      %v2441 = vrot.slane %v2102, 6
      %v2442 = vsel %vm780, %v2439, %v2441
      %v2443 = vrot.slane %v2103, 6
      %v2444 = vsel %vm780, %v2441, %v2443
      %v2445 = vrot.slane %v2104, 6
      %v2446 = vsel %vm780, %v2443, %v2445
      %v2447 = vrot.slane %v2105, 6
      %v2448 = vsel %vm780, %v2445, %v2447
      %v2449 = vrot.slane %v2106, 6
      %v2450 = vsel %vm780, %v2447, %v2449
      %v2451 = vrot.slane %v2107, 6
      %v2452 = vsel %vm780, %v2449, %v2451
      %v2453 = vrot.slane %v2108, 6
      %v2454 = vsel %vm780, %v2451, %v2453
      %v2455 = vrot.slane %v2109, 6
      %v2456 = vsel %vm780, %v2453, %v2455
      %v2457 = vrot.slane %v2110, 6
      %v2458 = vsel %vm780, %v2455, %v2457
      %v2459 = vrot.slane %v2111, 6
      %v2460 = vsel %vm780, %v2457, %v2459
      %v2461 = vrot.slane %v2112, 6
      %v2462 = vsel %vm780, %v2459, %v2461
      %v2463 = vrot.slane %v2113, 6
      %v2464 = vsel %vm780, %v2461, %v2463
      %v2465 = vrot.slane %v2114, 6
      %v2466 = vsel %vm780, %v2463, %v2465
      %v2467 = vrot.slane %v2115, 6
      %v2468 = vsel %vm780, %v2465, %v2467
      %v2469 = vrot.slane %v2116, 6
      %v2470 = vsel %vm780, %v2467, %v2469
      %v2504 = vmul.f32 %v1475, %v2408
      %v2505 = vmul.f32 %v1476, %v2410
      %v2506 = vmul.f32 %v1477, %v2412
      %v2507 = vmul.f32 %v1478, %v2414
      %v2508 = vmul.f32 %v1479, %v2416
      %v2509 = vmul.f32 %v1480, %v2418
      %v2510 = vmul.f32 %v1481, %v2420
      %v2511 = vmul.f32 %v1482, %v2422
      %v2512 = vmul.f32 %v1483, %v2424
      %v2513 = vmul.f32 %v1484, %v2426
      %v2514 = vmul.f32 %v1485, %v2428
      %v2515 = vmul.f32 %v1486, %v2430
      %v2516 = vmul.f32 %v1487, %v2432
      %v2517 = vmul.f32 %v1488, %v2434
      %v2518 = vmul.f32 %v1489, %v2436
      %v2519 = vmul.f32 %v1490, %v2438
      %v2520 = vmul.f32 %v1491, %v2440
      %v2521 = vmul.f32 %v1492, %v2442
      %v2522 = vmul.f32 %v1493, %v2444
      %v2523 = vmul.f32 %v1494, %v2446
      %v2524 = vmul.f32 %v1495, %v2448
      %v2525 = vmul.f32 %v1496, %v2450
      %v2526 = vmul.f32 %v1497, %v2452
      %v2527 = vmul.f32 %v1498, %v2454
      %v2528 = vmul.f32 %v1499, %v2456
      %v2529 = vmul.f32 %v1500, %v2458
      %v2530 = vmul.f32 %v1501, %v2460
      %v2531 = vmul.f32 %v1502, %v2462
      %v2532 = vmul.f32 %v1503, %v2464
      %v2533 = vmul.f32 %v1504, %v2466
      %v2534 = vmul.f32 %v1505, %v2468
      %v2535 = vmul.f32 %v1506, %v2470
      %v2536 = vmul.f32 %v1507, %v2469
      %vm2570 = vcmask 1046528
      %v2571 = vrot.slane %v2504, 1
      %v2572 = vrot.slane %v2505, 1
      %v2573 = vsel %vm2570, %v2571, %v2572
      %v2574 = vrot.slane %v2506, 1
      %v2575 = vsel %vm2570, %v2572, %v2574
      %v2576 = vrot.slane %v2507, 1
      %v2577 = vsel %vm2570, %v2574, %v2576
      %v2578 = vrot.slane %v2508, 1
      %v2579 = vsel %vm2570, %v2576, %v2578
      %v2580 = vrot.slane %v2509, 1
      %v2581 = vsel %vm2570, %v2578, %v2580
      %v2582 = vrot.slane %v2510, 1
      %v2583 = vsel %vm2570, %v2580, %v2582
      %v2584 = vrot.slane %v2511, 1
      %v2585 = vsel %vm2570, %v2582, %v2584
      %v2586 = vrot.slane %v2512, 1
      %v2587 = vsel %vm2570, %v2584, %v2586
      %v2588 = vrot.slane %v2513, 1
      %v2589 = vsel %vm2570, %v2586, %v2588
      %v2590 = vrot.slane %v2514, 1
      %v2591 = vsel %vm2570, %v2588, %v2590
      %v2592 = vrot.slane %v2515, 1
      %v2593 = vsel %vm2570, %v2590, %v2592
      %v2594 = vrot.slane %v2516, 1
      %v2595 = vsel %vm2570, %v2592, %v2594
      %v2596 = vrot.slane %v2517, 1
      %v2597 = vsel %vm2570, %v2594, %v2596
      %v2598 = vrot.slane %v2518, 1
      %v2599 = vsel %vm2570, %v2596, %v2598
      %v2600 = vrot.slane %v2519, 1
      %v2601 = vsel %vm2570, %v2598, %v2600
      %v2602 = vrot.slane %v2520, 1
      %v2603 = vsel %vm2570, %v2600, %v2602
      %v2604 = vrot.slane %v2521, 1
      %v2605 = vsel %vm2570, %v2602, %v2604
      %v2606 = vrot.slane %v2522, 1
      %v2607 = vsel %vm2570, %v2604, %v2606
      %v2608 = vrot.slane %v2523, 1
      %v2609 = vsel %vm2570, %v2606, %v2608
      %v2610 = vrot.slane %v2524, 1
      %v2611 = vsel %vm2570, %v2608, %v2610
      %v2612 = vrot.slane %v2525, 1
      %v2613 = vsel %vm2570, %v2610, %v2612
      %v2614 = vrot.slane %v2526, 1
      %v2615 = vsel %vm2570, %v2612, %v2614
      %v2616 = vrot.slane %v2527, 1
      %v2617 = vsel %vm2570, %v2614, %v2616
      %v2618 = vrot.slane %v2528, 1
      %v2619 = vsel %vm2570, %v2616, %v2618
      %v2620 = vrot.slane %v2529, 1
      %v2621 = vsel %vm2570, %v2618, %v2620
      %v2622 = vrot.slane %v2530, 1
      %v2623 = vsel %vm2570, %v2620, %v2622
      %v2624 = vrot.slane %v2531, 1
      %v2625 = vsel %vm2570, %v2622, %v2624
      %v2626 = vrot.slane %v2532, 1
      %v2627 = vsel %vm2570, %v2624, %v2626
      %v2628 = vrot.slane %v2533, 1
      %v2629 = vsel %vm2570, %v2626, %v2628
      %v2630 = vrot.slane %v2534, 1
      %v2631 = vsel %vm2570, %v2628, %v2630
      %v2632 = vrot.slane %v2535, 1
      %v2633 = vsel %vm2570, %v2630, %v2632
      %v2634 = vrot.slane %v2536, 1
      %v2635 = vsel %vm2570, %v2632, %v2634
      %2636 = vrot.lane.b32.xlu0 %v2573, 112
      %v2637 = vpop.permute.xlu0 %2636
      %2638 = vrot.lane.b32.xlu0 %v2575, 112
      %v2639 = vpop.permute.xlu0 %2638
      %2640 = vrot.lane.b32.xlu0 %v2577, 112
      %v2641 = vpop.permute.xlu0 %2640
      %2642 = vrot.lane.b32.xlu0 %v2579, 112
      %v2643 = vpop.permute.xlu0 %2642
      %2644 = vrot.lane.b32.xlu0 %v2581, 112
      %v2645 = vpop.permute.xlu0 %2644
      %2646 = vrot.lane.b32.xlu0 %v2583, 112
      %v2647 = vpop.permute.xlu0 %2646
      %2648 = vrot.lane.b32.xlu0 %v2585, 112
      %v2649 = vpop.permute.xlu0 %2648
      %2650 = vrot.lane.b32.xlu0 %v2587, 112
      %v2651 = vpop.permute.xlu0 %2650
      %2652 = vrot.lane.b32.xlu0 %v2589, 112
      %v2653 = vpop.permute.xlu0 %2652
      %2654 = vrot.lane.b32.xlu0 %v2591, 112
      %v2655 = vpop.permute.xlu0 %2654
      %2656 = vrot.lane.b32.xlu0 %v2593, 112
      %v2657 = vpop.permute.xlu0 %2656
      %2658 = vrot.lane.b32.xlu0 %v2595, 112
      %v2659 = vpop.permute.xlu0 %2658
      %2660 = vrot.lane.b32.xlu0 %v2597, 112
      %v2661 = vpop.permute.xlu0 %2660
      %2662 = vrot.lane.b32.xlu0 %v2599, 112
      %v2663 = vpop.permute.xlu0 %2662
      %2664 = vrot.lane.b32.xlu0 %v2601, 112
      %v2665 = vpop.permute.xlu0 %2664
      %2666 = vrot.lane.b32.xlu0 %v2603, 112
      %v2667 = vpop.permute.xlu0 %2666
      %2668 = vrot.lane.b32.xlu0 %v2605, 112
      %v2669 = vpop.permute.xlu0 %2668
      %2670 = vrot.lane.b32.xlu0 %v2607, 112
      %v2671 = vpop.permute.xlu0 %2670
      %2672 = vrot.lane.b32.xlu0 %v2609, 112
      %v2673 = vpop.permute.xlu0 %2672
      %2674 = vrot.lane.b32.xlu0 %v2611, 112
      %v2675 = vpop.permute.xlu0 %2674
      %2676 = vrot.lane.b32.xlu0 %v2613, 112
      %v2677 = vpop.permute.xlu0 %2676
      %2678 = vrot.lane.b32.xlu0 %v2615, 112
      %v2679 = vpop.permute.xlu0 %2678
      %2680 = vrot.lane.b32.xlu0 %v2617, 112
      %v2681 = vpop.permute.xlu0 %2680
      %2682 = vrot.lane.b32.xlu0 %v2619, 112
      %v2683 = vpop.permute.xlu0 %2682
      %2684 = vrot.lane.b32.xlu0 %v2621, 112
      %v2685 = vpop.permute.xlu0 %2684
      %2686 = vrot.lane.b32.xlu0 %v2623, 112
      %v2687 = vpop.permute.xlu0 %2686
      %2688 = vrot.lane.b32.xlu0 %v2625, 112
      %v2689 = vpop.permute.xlu0 %2688
      %2690 = vrot.lane.b32.xlu0 %v2627, 112
      %v2691 = vpop.permute.xlu0 %2690
      %2692 = vrot.lane.b32.xlu0 %v2629, 112
      %v2693 = vpop.permute.xlu0 %2692
      %2694 = vrot.lane.b32.xlu0 %v2631, 112
      %v2695 = vpop.permute.xlu0 %2694
      %2696 = vrot.lane.b32.xlu0 %v2633, 112
      %v2697 = vpop.permute.xlu0 %2696
      %2698 = vrot.lane.b32.xlu0 %v2635, 112
      %v2699 = vpop.permute.xlu0 %2698
      %2700 = vrot.lane.b32.xlu0 %v2634, 112
      %v2701 = vpop.permute.xlu0 %2700
      %v2735 = vadd.f32 %v2343, %v2637
      %v2736 = vadd.f32 %v2344, %v2639
      %v2737 = vadd.f32 %v2345, %v2641
      %v2738 = vadd.f32 %v2346, %v2643
      %v2739 = vadd.f32 %v2347, %v2645
      %v2740 = vadd.f32 %v2348, %v2647
      %v2741 = vadd.f32 %v2349, %v2649
      %v2742 = vadd.f32 %v2350, %v2651
      %v2743 = vadd.f32 %v2351, %v2653
      %v2744 = vadd.f32 %v2352, %v2655
      %v2745 = vadd.f32 %v2353, %v2657
      %v2746 = vadd.f32 %v2354, %v2659
      %v2747 = vadd.f32 %v2355, %v2661
      %v2748 = vadd.f32 %v2356, %v2663
      %v2749 = vadd.f32 %v2357, %v2665
      %v2750 = vadd.f32 %v2358, %v2667
      %v2751 = vadd.f32 %v2359, %v2669
      %v2752 = vadd.f32 %v2360, %v2671
      %v2753 = vadd.f32 %v2361, %v2673
      %v2754 = vadd.f32 %v2362, %v2675
      %v2755 = vadd.f32 %v2363, %v2677
      %v2756 = vadd.f32 %v2364, %v2679
      %v2757 = vadd.f32 %v2365, %v2681
      %v2758 = vadd.f32 %v2366, %v2683
      %v2759 = vadd.f32 %v2367, %v2685
      %v2760 = vadd.f32 %v2368, %v2687
      %v2761 = vadd.f32 %v2369, %v2689
      %v2762 = vadd.f32 %v2370, %v2691
      %v2763 = vadd.f32 %v2371, %v2693
      %v2764 = vadd.f32 %v2372, %v2695
      %v2765 = vadd.f32 %v2373, %v2697
      %v2766 = vadd.f32 %v2374, %v2699
      %v2767 = vadd.f32 %v2375, %v2701
      %v2769 = vperm.slane %v608, 0
      %2770 = vrot.lane.b32.xlu0 %v2769, 16
      %v2771 = vpop.permute.xlu0 %2770
      %v2773 = vmul.f32 %v2735, %v2771
      %v2774 = vmul.f32 %v2736, %v2771
      %v2775 = vmul.f32 %v2737, %v2771
      %v2776 = vmul.f32 %v2738, %v2771
      %v2777 = vmul.f32 %v2739, %v2771
      %v2778 = vmul.f32 %v2740, %v2771
      %v2779 = vmul.f32 %v2741, %v2771
      %v2780 = vmul.f32 %v2742, %v2771
      %v2781 = vmul.f32 %v2743, %v2771
      %v2782 = vmul.f32 %v2744, %v2771
      %v2783 = vmul.f32 %v2745, %v2771
      %v2784 = vmul.f32 %v2746, %v2771
      %v2785 = vmul.f32 %v2747, %v2771
      %v2786 = vmul.f32 %v2748, %v2771
      %v2787 = vmul.f32 %v2749, %v2771
      %v2788 = vmul.f32 %v2750, %v2771
      %v2789 = vmul.f32 %v2751, %v2771
      %v2790 = vmul.f32 %v2752, %v2771
      %v2791 = vmul.f32 %v2753, %v2771
      %v2792 = vmul.f32 %v2754, %v2771
      %v2793 = vmul.f32 %v2755, %v2771
      %v2794 = vmul.f32 %v2756, %v2771
      %v2795 = vmul.f32 %v2757, %v2771
      %v2796 = vmul.f32 %v2758, %v2771
      %v2797 = vmul.f32 %v2759, %v2771
      %v2798 = vmul.f32 %v2760, %v2771
      %v2799 = vmul.f32 %v2761, %v2771
      %v2800 = vmul.f32 %v2762, %v2771
      %v2801 = vmul.f32 %v2763, %v2771
      %v2802 = vmul.f32 %v2764, %v2771
      %v2803 = vmul.f32 %v2765, %v2771
      %v2804 = vmul.f32 %v2766, %v2771
      %v2805 = vmul.f32 %v2767, %v2771
      %v2807 = vperm.slane %v609, 0
      %2808 = vrot.lane.b32.xlu0 %v2807, 16
      %v2809 = vpop.permute.xlu0 %2808
      %v2811 = vadd.f32 %v2773, %v2809
      %v2812 = vadd.f32 %v2774, %v2809
      %v2813 = vadd.f32 %v2775, %v2809
      %v2814 = vadd.f32 %v2776, %v2809
      %v2815 = vadd.f32 %v2777, %v2809
      %v2816 = vadd.f32 %v2778, %v2809
      %v2817 = vadd.f32 %v2779, %v2809
      %v2818 = vadd.f32 %v2780, %v2809
      %v2819 = vadd.f32 %v2781, %v2809
      %v2820 = vadd.f32 %v2782, %v2809
      %v2821 = vadd.f32 %v2783, %v2809
      %v2822 = vadd.f32 %v2784, %v2809
      %v2823 = vadd.f32 %v2785, %v2809
      %v2824 = vadd.f32 %v2786, %v2809
      %v2825 = vadd.f32 %v2787, %v2809
      %v2826 = vadd.f32 %v2788, %v2809
      %v2827 = vadd.f32 %v2789, %v2809
      %v2828 = vadd.f32 %v2790, %v2809
      %v2829 = vadd.f32 %v2791, %v2809
      %v2830 = vadd.f32 %v2792, %v2809
      %v2831 = vadd.f32 %v2793, %v2809
      %v2832 = vadd.f32 %v2794, %v2809
      %v2833 = vadd.f32 %v2795, %v2809
      %v2834 = vadd.f32 %v2796, %v2809
      %v2835 = vadd.f32 %v2797, %v2809
      %v2836 = vadd.f32 %v2798, %v2809
      %v2837 = vadd.f32 %v2799, %v2809
      %v2838 = vadd.f32 %v2800, %v2809
      %v2839 = vadd.f32 %v2801, %v2809
      %v2840 = vadd.f32 %v2802, %v2809
      %v2841 = vadd.f32 %v2803, %v2809
      %v2842 = vadd.f32 %v2804, %v2809
      %v2843 = vadd.f32 %v2805, %v2809
      %v2844 = vmax.f32 %v2811, 0.0
      %v2845 = vmax.f32 %v2812, 0.0
      %v2846 = vmax.f32 %v2813, 0.0
      %v2847 = vmax.f32 %v2814, 0.0
      %v2848 = vmax.f32 %v2815, 0.0
      %v2849 = vmax.f32 %v2816, 0.0
      %v2850 = vmax.f32 %v2817, 0.0
      %v2851 = vmax.f32 %v2818, 0.0
      %v2852 = vmax.f32 %v2819, 0.0
      %v2853 = vmax.f32 %v2820, 0.0
      %v2854 = vmax.f32 %v2821, 0.0
      %v2855 = vmax.f32 %v2822, 0.0
      %v2856 = vmax.f32 %v2823, 0.0
      %v2857 = vmax.f32 %v2824, 0.0
      %v2858 = vmax.f32 %v2825, 0.0
      %v2859 = vmax.f32 %v2826, 0.0
      %v2860 = vmax.f32 %v2827, 0.0
      %v2861 = vmax.f32 %v2828, 0.0
      %v2862 = vmax.f32 %v2829, 0.0
      %v2863 = vmax.f32 %v2830, 0.0
      %v2864 = vmax.f32 %v2831, 0.0
      %v2865 = vmax.f32 %v2832, 0.0
      %v2866 = vmax.f32 %v2833, 0.0
      %v2867 = vmax.f32 %v2834, 0.0
      %v2868 = vmax.f32 %v2835, 0.0
      %v2869 = vmax.f32 %v2836, 0.0
      %v2870 = vmax.f32 %v2837, 0.0
      %v2871 = vmax.f32 %v2838, 0.0
      %v2872 = vmax.f32 %v2839, 0.0
      %v2873 = vmax.f32 %v2840, 0.0
      %v2874 = vmax.f32 %v2841, 0.0
      %v2875 = vmax.f32 %v2842, 0.0
      %v2876 = vmax.f32 %v2843, 0.0
      %2910 = vrot.lane.b32.xlu0 %v2844, 112
      %v2911 = vpop.permute.xlu0 %2910
      %2912 = vrot.lane.b32.xlu0 %v2845, 112
      %v2913 = vpop.permute.xlu0 %2912
      %2914 = vrot.lane.b32.xlu0 %v2846, 112
      %v2915 = vpop.permute.xlu0 %2914
      %2916 = vrot.lane.b32.xlu0 %v2847, 112
      %v2917 = vpop.permute.xlu0 %2916
      %2918 = vrot.lane.b32.xlu0 %v2848, 112
      %v2919 = vpop.permute.xlu0 %2918
      %2920 = vrot.lane.b32.xlu0 %v2849, 112
      %v2921 = vpop.permute.xlu0 %2920
      %2922 = vrot.lane.b32.xlu0 %v2850, 112
      %v2923 = vpop.permute.xlu0 %2922
      %2924 = vrot.lane.b32.xlu0 %v2851, 112
      %v2925 = vpop.permute.xlu0 %2924
      %2926 = vrot.lane.b32.xlu0 %v2852, 112
      %v2927 = vpop.permute.xlu0 %2926
      %2928 = vrot.lane.b32.xlu0 %v2853, 112
      %v2929 = vpop.permute.xlu0 %2928
      %2930 = vrot.lane.b32.xlu0 %v2854, 112
      %v2931 = vpop.permute.xlu0 %2930
      %2932 = vrot.lane.b32.xlu0 %v2855, 112
      %v2933 = vpop.permute.xlu0 %2932
      %2934 = vrot.lane.b32.xlu0 %v2856, 112
      %v2935 = vpop.permute.xlu0 %2934
      %2936 = vrot.lane.b32.xlu0 %v2857, 112
      %v2937 = vpop.permute.xlu0 %2936
      %2938 = vrot.lane.b32.xlu0 %v2858, 112
      %v2939 = vpop.permute.xlu0 %2938
      %2940 = vrot.lane.b32.xlu0 %v2859, 112
      %v2941 = vpop.permute.xlu0 %2940
      %2942 = vrot.lane.b32.xlu0 %v2860, 112
      %v2943 = vpop.permute.xlu0 %2942
      %2944 = vrot.lane.b32.xlu0 %v2861, 112
      %v2945 = vpop.permute.xlu0 %2944
      %2946 = vrot.lane.b32.xlu0 %v2862, 112
      %v2947 = vpop.permute.xlu0 %2946
      %2948 = vrot.lane.b32.xlu0 %v2863, 112
      %v2949 = vpop.permute.xlu0 %2948
      %2950 = vrot.lane.b32.xlu0 %v2864, 112
      %v2951 = vpop.permute.xlu0 %2950
      %2952 = vrot.lane.b32.xlu0 %v2865, 112
      %v2953 = vpop.permute.xlu0 %2952
      %2954 = vrot.lane.b32.xlu0 %v2866, 112
      %v2955 = vpop.permute.xlu0 %2954
      %2956 = vrot.lane.b32.xlu0 %v2867, 112
      %v2957 = vpop.permute.xlu0 %2956
      %2958 = vrot.lane.b32.xlu0 %v2868, 112
      %v2959 = vpop.permute.xlu0 %2958
      %2960 = vrot.lane.b32.xlu0 %v2869, 112
      %v2961 = vpop.permute.xlu0 %2960
      %2962 = vrot.lane.b32.xlu0 %v2870, 112
      %v2963 = vpop.permute.xlu0 %2962
      %2964 = vrot.lane.b32.xlu0 %v2871, 112
      %v2965 = vpop.permute.xlu0 %2964
      %2966 = vrot.lane.b32.xlu0 %v2872, 112
      %v2967 = vpop.permute.xlu0 %2966
      %2968 = vrot.lane.b32.xlu0 %v2873, 112
      %v2969 = vpop.permute.xlu0 %2968
      %2970 = vrot.lane.b32.xlu0 %v2874, 112
      %v2971 = vpop.permute.xlu0 %2970
      %2972 = vrot.lane.b32.xlu0 %v2875, 112
      %v2973 = vpop.permute.xlu0 %2972
      %2974 = vrot.lane.b32.xlu0 %v2876, 112
      %v2975 = vpop.permute.xlu0 %2974
      %vm3009 = vcmask 130049
      %3010 = vst.msk [vmem:[%s197 - $0x1] sm:$0xfe] %vm3009, %v2911
      %vm3011 = vcmask 130048
      %3012 = vst.msk [vmem:[%s197 + $0x7] sm:$0xff] %vm3011, %v2913
      %3013 = vst.msk [vmem:[%s197 + $0xf] sm:$0xff] %vm3011, %v2915
      %3014 = vst.msk [vmem:[%s197 + $0x17] sm:$0xff] %vm3011, %v2917
      %3015 = vst.msk [vmem:[%s197 + $0x1f] sm:$0xff] %vm3011, %v2919
      %3016 = vst.msk [vmem:[%s197 + $0x27] sm:$0xff] %vm3011, %v2921
      %3017 = vst.msk [vmem:[%s197 + $0x2f] sm:$0xff] %vm3011, %v2923
      %3018 = vst.msk [vmem:[%s197 + $0x37] sm:$0xff] %vm3011, %v2925
      %3019 = vst.msk [vmem:[%s197 + $0x3f] sm:$0xff] %vm3011, %v2927
      %3020 = vst.msk [vmem:[%s197 + $0x47] sm:$0xff] %vm3011, %v2929
      %3021 = vst.msk [vmem:[%s197 + $0x4f] sm:$0xff] %vm3011, %v2931
      %3022 = vst.msk [vmem:[%s197 + $0x57] sm:$0xff] %vm3011, %v2933
      %3023 = vst.msk [vmem:[%s197 + $0x5f] sm:$0xff] %vm3011, %v2935
      %3024 = vst.msk [vmem:[%s197 + $0x67] sm:$0xff] %vm3011, %v2937
      %3025 = vst.msk [vmem:[%s197 + $0x6f] sm:$0xff] %vm3011, %v2939
      %3026 = vst.msk [vmem:[%s197 + $0x77] sm:$0xff] %vm3011, %v2941
      %3027 = vst.msk [vmem:[%s197 + $0x7f] sm:$0xff] %vm3011, %v2943
      %3028 = vst.msk [vmem:[%s197 + $0x87] sm:$0xff] %vm3011, %v2945
      %3029 = vst.msk [vmem:[%s197 + $0x8f] sm:$0xff] %vm3011, %v2947
      %3030 = vst.msk [vmem:[%s197 + $0x97] sm:$0xff] %vm3011, %v2949
      %3031 = vst.msk [vmem:[%s197 + $0x9f] sm:$0xff] %vm3011, %v2951
      %3032 = vst.msk [vmem:[%s197 + $0xa7] sm:$0xff] %vm3011, %v2953
      %3033 = vst.msk [vmem:[%s197 + $0xaf] sm:$0xff] %vm3011, %v2955
      %3034 = vst.msk [vmem:[%s197 + $0xb7] sm:$0xff] %vm3011, %v2957
      %3035 = vst.msk [vmem:[%s197 + $0xbf] sm:$0xff] %vm3011, %v2959
      %3036 = vst.msk [vmem:[%s197 + $0xc7] sm:$0xff] %vm3011, %v2961
      %3037 = vst.msk [vmem:[%s197 + $0xcf] sm:$0xff] %vm3011, %v2963
      %3038 = vst.msk [vmem:[%s197 + $0xd7] sm:$0xff] %vm3011, %v2965
      %3039 = vst.msk [vmem:[%s197 + $0xdf] sm:$0xff] %vm3011, %v2967
      %3040 = vst.msk [vmem:[%s197 + $0xe7] sm:$0xff] %vm3011, %v2969
      %3041 = vst.msk [vmem:[%s197 + $0xef] sm:$0xff] %vm3011, %v2971
      %3042 = vst.msk [vmem:[%s197 + $0xf7] sm:$0xff] %vm3011, %v2973
      %vm3043 = vcmask 122880
      %3044 = vst.msk [vmem:[%s197 + $0xff] sm:$0x1] %vm3043, %v2975
      %p3045 = scmp.lt.s32.totalorder %s15, 1
      %s3046 = scalar_select %p3045, %s15, 1
      %s3047 = smul.addr %s3046, 32
      %s3048 = smul.addr %s3047, 8
      %s3049 = scalar_lea.vmem %s4, %s3048
      // Predicated region
      $region37: #{tpu_custom_call.1} parent=35 // pred_check
        %p3050 = pneg %p122
      $region38: #{tpu_custom_call.1} parent=35 // pred_check_branch
        %3052 = sbr.rel (%p3050) target = $region40
      $region39: #{tpu_custom_call.1} parent=35 // pred_region
        _
      $region40: #{tpu_custom_call.1} parent=35 // pred_fallthru
        _
    $region36: #{tpu_custom_call.1} parent=5 // pred_fallthru
      _
    %p3053 = scmp.le.s32.totalorder 2, %s10
    // Predicated region
    $region41: #{tpu_custom_call.1} parent=5 // pred_check
      %p3054 = pneg %p3053
    $region42: #{tpu_custom_call.1} parent=5 // pred_check_branch
      %3056 = sbr.rel (%p3054) target = $region44
    $region43: #{tpu_custom_call.1} parent=5 // pred_region
      %s3057 = ssub.s32 %s10, 2
      // Predicated region
      $region45: #{tpu_custom_call.1} parent=43 // pred_check
        %p3058 = pneg %p128
      $region46: #{tpu_custom_call.1} parent=43 // pred_check_branch
        %3060 = sbr.rel (%p3058) target = $region48
      $region47: #{tpu_custom_call.1} parent=43 // pred_region
        %p3061 = scmp.lt.s32.totalorder %s16, 1
        %s3062 = scalar_select %p3061, %s16, 1
        %s3063 = smul.addr %s3062, 32
        %s3064 = smul.addr %s3063, 8
        %s3065 = scalar_lea.vmem %s4, %s3064
      $region48: #{tpu_custom_call.1} parent=43 // pred_fallthru
        _
    $region44: #{tpu_custom_call.1} parent=5 // pred_fallthru
      _
  $region6: #{tpu_custom_call.1} parent=0 // loop_footer
    %s14 = sadd.s32 1, %s10
  $region7: #{tpu_custom_call.1} parent=0 // loop_footer_branch
    %9 = sbr.rel target = $region3
  $region8: #{tpu_custom_call.1} parent=0 // loop_exit
    _

</llo_original>
